<compile_context>
chip_gen: v5e
topology: v5e:2x2
jax: 0.10.0
libtpu: 0.0.40
codegen_flags: <defaults>
</compile_context>

<pallas_src>
import functools
import math

import jax
import jax.numpy as jnp
from jax import lax
from jax.experimental import pallas as pl
from jax.experimental.pallas import tpu as pltpu

_MIB = 1024 * 1024


def _attn_kernel(x_ref, wq_ref, bq_ref, wkv_ref, bkv_ref, wo_ref, bo_ref,
                 o_ref, w_ref, kv_scr, *, tq, kv_chunk):
    # x_ref  : (1, S, E)  full sequence (resident across query tiles of a batch)
    # wq_ref : (E, E)     pre-transposed Q projection, 1/sqrt(E) folded in
    # bq_ref : (1, E)     Q bias, 1/sqrt(E) folded in
    # wkv_ref: (E, 2E)    pre-transposed fused K|V projection
    # bkv_ref: (1, 2E)
    # wo_ref : (E, E)     pre-transposed output projection
    # bo_ref : (1, E)
    # o_ref  : (1, TQ, E) attention-output tile
    # w_ref  : (1, TQ, S) attention-weights tile (input dtype)
    # kv_scr : (S, 2E)    VMEM scratch holding K|V for the current batch element
    qi = pl.program_id(1)
    S = x_ref.shape[1]
    E = x_ref.shape[2]

    # ---- Fused K|V projection: once per batch element, chunked over S so the
    # fp32 intermediate never exceeds (kv_chunk, 2E). ----
    @pl.when(qi == 0)
    def _():
        n_chunks = S // kv_chunk  # static

        def project(c):
            start = pl.multiple_of(c * kv_chunk, kv_chunk)
            xc = x_ref[0, pl.ds(start, kv_chunk), :]                  # (C, E)
            kv = jnp.dot(xc, wkv_ref[...], preferred_element_type=jnp.float32)
            kv = kv + bkv_ref[...]
            kv_scr[pl.ds(start, kv_chunk), :] = kv.astype(kv_scr.dtype)

        if n_chunks == 1:
            project(0)
        else:
            def body(c, carry):
                project(c)
                return carry
            lax.fori_loop(0, n_chunks, body, 0)

    # ---- Q projection for the current query tile, sliced from the resident
    # full-sequence block (no separate query-tile input / DMA). ----
    q_start = pl.multiple_of(qi * tq, tq)
    xq = x_ref[0, pl.ds(q_start, tq), :]                              # (TQ, E)
    q = jnp.dot(xq, wq_ref[...], preferred_element_type=jnp.float32)
    q = q + bq_ref[...]                                               # scale already folded in

    k = kv_scr[:, :E]                                                 # (S, E)
    v = kv_scr[:, E:]                                                 # (S, E)

    # Q @ K^T without materializing a transpose: contract the feature dims.
    scores = lax.dot_general(q.astype(k.dtype), k,
                             (((1,), (1,)), ((), ())),
                             preferred_element_type=jnp.float32)      # (TQ, S)

    # Numerically stable softmax over keys.
    # TODO(synk): on v6e/v7x with small E the exp chain could run in bf16 to
    # relieve the single EUP; kept fp32 here for exact parity with the
    # fp32 reference.
    m = jnp.max(scores, axis=-1, keepdims=True)
    p = jnp.exp(scores - m)
    denom = jnp.sum(p, axis=-1, keepdims=True)
    r = pl.reciprocal(denom, approx=True)        # EUP slot, nearly free
    r = r * (2.0 - denom * r)                    # one Newton step -> ~fp32 accuracy
    attn_w = p * r                                                    # (TQ, S)

    ctx = jnp.dot(attn_w.astype(v.dtype), v,
                  preferred_element_type=jnp.float32)                 # (TQ, E)
    out = jnp.dot(ctx.astype(wo_ref.dtype), wo_ref[...],
                  preferred_element_type=jnp.float32)
    out = out + bo_ref[...]

    o_ref[0] = out.astype(o_ref.dtype)
    # num_heads == 1 -> "averaged" attention weights == single-head weights.
    w_ref[0] = attn_w.astype(w_ref.dtype)


def _vmem_capacity_bytes():
    try:
        return int(pltpu.get_tpu_info().vmem_capacity_bytes)
    except Exception:
        return 128 * _MIB  # v5e/v6e default


def _choose_query_tile(S, small_vmem):
    """Whole-S for short sequences; otherwise an aligned divisor so every query
    tile is full. Cap at 256 on small-VMEM (v7x-class) parts where the
    double-buffered (tq, S) weights tile would otherwise blow 64 MiB."""
    if S <= 256:
        return S
    candidates = (256, 128) if small_vmem else (512, 256, 128)
    for tq in candidates:
        if S % tq == 0:
            return tq
    # TODO(synk): tile with a masked tail for S not divisible by 128 instead of
    # falling back to one (S, S) block.
    return S


def _choose_kv_chunk(S):
    if S <= 512:
        return S
    for c in (512, 256, 128):
        if S % c == 0:
            return c
    return S


def _build_specs(S, E, tq, single_buffer_consts):
    def const_spec(shape, index_map):
        # Constant-index blocks don't need double-buffering: halve their VMEM.
        if single_buffer_consts:
            return pl.BlockSpec(shape, index_map, pipeline_mode=pl.Buffered(1))
        return pl.BlockSpec(shape, index_map)

    in_specs = [
        const_spec((1, S, E), lambda b, qi: (b, 0, 0)),      # x (full sequence)
        const_spec((E, E), lambda b, qi: (0, 0)),            # Wq^T (scaled)
        const_spec((1, E), lambda b, qi: (0, 0)),            # bq  (scaled)
        const_spec((E, 2 * E), lambda b, qi: (0, 0)),        # Wkv^T (fused K|V)
        const_spec((1, 2 * E), lambda b, qi: (0, 0)),        # bkv
        const_spec((E, E), lambda b, qi: (0, 0)),            # Wo^T
        const_spec((1, E), lambda b, qi: (0, 0)),            # bo
    ]
    out_specs = [
        pl.BlockSpec((1, tq, E), lambda b, qi: (b, qi, 0)),  # attn_output
        pl.BlockSpec((1, tq, S), lambda b, qi: (b, qi, 0)),  # attn_weights
    ]
    return in_specs, out_specs


def self_attention(x, in_proj_w, in_proj_b, out_proj_w, out_proj_b):
    """x: (B, S, E) -> (attn_output (B, S, E), attn_weights (B, S, S))."""
    B, S, E = x.shape
    scale = 1.0 / math.sqrt(E)

    # torch packed layout: rows [0:E)=Q, [E:2E)=K, [2E:3E)=V, and y = x @ W.T.
    # Pre-transpose once on the host and fold the query scale into Wq/bq.
    # TODO(synk): for fp32 callers on v5e/v6e a bf16 cast of x and weights
    # (keeping fp32 accumulation) would cut MXU time ~3x at a precision cost;
    # kept in the input dtype here for exact reference parity.
    w_in_t = jnp.transpose(in_proj_w)                         # (E, 3E)
    wq_t = (w_in_t[:, :E] * scale).astype(x.dtype)            # (E, E)
    wkv_t = w_in_t[:, E:].astype(x.dtype)                     # (E, 2E) fused K|V
    bq = (in_proj_b[:E] * scale).reshape(1, E).astype(jnp.float32)
    bkv = in_proj_b[E:].reshape(1, 2 * E).astype(jnp.float32)
    wo_t = jnp.transpose(out_proj_w).astype(x.dtype)          # (E, E)
    bo = out_proj_b.reshape(1, E).astype(jnp.float32)

    vmem_cap = _vmem_capacity_bytes()
    small_vmem = vmem_cap <= 64 * _MIB                        # v7x-class TC
    vmem_limit = min(56 * _MIB if small_vmem else 100 * _MIB,
                     int(vmem_cap * 7 // 8))

    tq = _choose_query_tile(S, small_vmem)
    kv_chunk = _choose_kv_chunk(S)
    nq = S // tq

    kernel = functools.partial(_attn_kernel, tq=tq, kv_chunk=kv_chunk)

    out_shapes = (
        jax.ShapeDtypeStruct((B, S, E), x.dtype),
        # torch returns attention weights in the input dtype (not fp32).
        jax.ShapeDtypeStruct((B, S, S), x.dtype),
    )

    def run(single_buffer_consts):
        in_specs, out_specs = _build_specs(S, E, tq, single_buffer_consts)
        grid_spec = pltpu.PrefetchScalarGridSpec(
            num_scalar_prefetch=0,
            grid=(B, nq),
            in_specs=in_specs,
            out_specs=out_specs,
            scratch_shapes=[pltpu.VMEM((S, 2 * E), x.dtype)],  # cached K|V
        )
        return pl.pallas_call(
            kernel,
            out_shape=out_shapes,
            grid_spec=grid_spec,
            compiler_params=pltpu.CompilerParams(
                # Batch axis shards across TensorCores; query-tile axis stays
                # sequential so the K/V scratch written at qi == 0 is reused.
                dimension_semantics=("parallel", "arbitrary"),
                vmem_limit_bytes=vmem_limit,
            ),
        )(x, wq_t, bq, wkv_t, bkv, wo_t, bo)

    # TODO(synk): for B < number-of-TensorCores (v7x small-batch inference),
    # hoist the K|V projection out of this kernel so the query-tile axis can be
    # marked "parallel" and both cores are used.
    try:
        return run(single_buffer_consts=True)
    except Exception:
        # Fallback for jax versions without BlockSpec(pipeline_mode=...).
        return run(single_buffer_consts=False)


def _reference(x, in_proj_w, in_proj_b, out_proj_w, out_proj_b):
    """Pure-JAX reference of torch.nn.MultiheadAttention(embed_dim, 1)."""
    B, S, E = x.shape
    qkv = jnp.einsum('bse,fe->bsf', x, in_proj_w) + in_proj_b    # (B, S, 3E)
    q, k, v = qkv[..., :E], qkv[..., E:2 * E], qkv[..., 2 * E:]
    scale = 1.0 / math.sqrt(E)
    scores = jnp.einsum('bqe,bke->bqk', q * scale, k)
    w = jax.nn.softmax(scores, axis=-1)
    ctx = jnp.einsum('bqk,bke->bqe', w, v)
    out = jnp.einsum('bqe,fe->bqf', ctx, out_proj_w) + out_proj_b
    return out, w


if __name__ == "__main__":
    B, S, E = 2, 8, 32   # batch, seq, embed_dim  (num_heads = 1)

    key = jax.random.PRNGKey(0)
    kx, kw, kwo = jax.random.split(key, 3)

    x = jax.random.normal(kx, (B, S, E), dtype=jnp.float32)

    # Deterministic parameter init (xavier-uniform-ish weights, zero biases,
    # matching nn.MultiheadAttention's defaults).
    limit_in = math.sqrt(6.0 / (E + 3 * E))
    in_proj_w = jax.random.uniform(kw, (3 * E, E), jnp.float32,
                                   minval=-limit_in, maxval=limit_in)
    in_proj_b = jnp.zeros((3 * E,), jnp.float32)
    limit_out = math.sqrt(6.0 / (E + E))
    out_proj_w = jax.random.uniform(kwo, (E, E), jnp.float32,
                                    minval=-limit_out, maxval=limit_out)
    out_proj_b = jnp.zeros((E,), jnp.float32)

    attn_out, attn_w = self_attention(x, in_proj_w, in_proj_b,
                                      out_proj_w, out_proj_b)
    jax.block_until_ready((attn_out, attn_w))

    ref_out, ref_w = _reference(x, in_proj_w, in_proj_b, out_proj_w, out_proj_b)
    assert attn_out.shape == (B, S, E)
    assert attn_w.shape == (B, S, S)
    assert jnp.allclose(attn_out, ref_out, atol=1e-4, rtol=1e-4)
    assert jnp.allclose(attn_w, ref_w.astype(attn_w.dtype), atol=1e-4, rtol=1e-4)

    print("KERNEL_OK")
</pallas_src>

<mosaic_0001>
module attributes {stable_mosaic.version = 11 : i64} {
  func.func @_attn_kernel(%arg0: i32, %arg1: i32, %arg2: memref<1x8x32xf32, #tpu.memory_space<vmem>>, %arg3: memref<32x32xf32, #tpu.memory_space<vmem>>, %arg4: memref<1x32xf32, #tpu.memory_space<vmem>>, %arg5: memref<32x64xf32, #tpu.memory_space<vmem>>, %arg6: memref<1x64xf32, #tpu.memory_space<vmem>>, %arg7: memref<32x32xf32, #tpu.memory_space<vmem>>, %arg8: memref<1x32xf32, #tpu.memory_space<vmem>>, %arg9: memref<1x8x32xf32, #tpu.memory_space<vmem>>, %arg10: memref<1x8x8xf32, #tpu.memory_space<vmem>>, %arg11: memref<8x64xf32, #tpu.memory_space<vmem>>) attributes {dimension_semantics = [#tpu.dimension_semantics<parallel>, #tpu.dimension_semantics<arbitrary>], iteration_bounds = array<i64: 2, 1>, scalar_prefetch = 0 : i64, scratch_operands = 1 : i64, tpu.core_type = #tpu.core_type<tc>, window_params = [{pipeline_mode = #tpu.pipeline_mode<synchronous>, transform_indices = @transform_0, window_bounds = array<i64: 1, 8, 32>}, {pipeline_mode = #tpu.pipeline_mode<synchronous>, transform_indices = @transform_1, window_bounds = array<i64: 32, 32>}, {pipeline_mode = #tpu.pipeline_mode<synchronous>, transform_indices = @transform_2, window_bounds = array<i64: 1, 32>}, {pipeline_mode = #tpu.pipeline_mode<synchronous>, transform_indices = @transform_3, window_bounds = array<i64: 32, 64>}, {pipeline_mode = #tpu.pipeline_mode<synchronous>, transform_indices = @transform_4, window_bounds = array<i64: 1, 64>}, {pipeline_mode = #tpu.pipeline_mode<synchronous>, transform_indices = @transform_5, window_bounds = array<i64: 32, 32>}, {pipeline_mode = #tpu.pipeline_mode<synchronous>, transform_indices = @transform_6, window_bounds = array<i64: 1, 32>}, {transform_indices = @transform_7, window_bounds = array<i64: 1, 8, 32>}, {transform_indices = @transform_8, window_bounds = array<i64: 1, 8, 8>}]} {
    %c0_i32 = arith.constant 0 : i32
    %0 = arith.cmpi eq, %arg1, %c0_i32 : i32
    %1 = arith.extui %0 : i1 to i32
    %c0_i32_0 = arith.constant 0 : i32
    %2 = arith.cmpi ne, %1, %c0_i32_0 : i32
    scf.if %2 {
      %c0_i32_25 = arith.constant 0 : i32
      %42 = tpu.assume_multiple %c0_i32_25, 8 : i32
      %c0_26 = arith.constant 0 : index
      %43 = arith.index_cast %42 : i32 to index
      %c0_27 = arith.constant 0 : index
      %44 = vector.load %arg2[%c0_26, %43, %c0_27] : memref<1x8x32xf32, #tpu.memory_space<vmem>>, vector<1x8x32xf32>
      %45 = vector.shape_cast %44 : vector<1x8x32xf32> to vector<8x32xf32>
      %c0_28 = arith.constant 0 : index
      %c0_29 = arith.constant 0 : index
      %46 = vector.load %arg5[%c0_28, %c0_29] : memref<32x64xf32, #tpu.memory_space<vmem>>, vector<32x64xf32>
      %cst_30 = arith.constant dense<0.000000e+00> : vector<8x64xf32>
      %47 = tpu.matmul %45, %46, %cst_30 {dimension_numbers = #tpu.dot_dimension_numbers<[1], [0], [0], [1], [0, 0, 1, 1], [], []>} : vector<8x32xf32>, vector<32x64xf32>, vector<8x64xf32> -> vector<8x64xf32>
      %c0_31 = arith.constant 0 : index
      %c0_32 = arith.constant 0 : index
      %48 = vector.load %arg6[%c0_31, %c0_32] : memref<1x64xf32, #tpu.memory_space<vmem>>, vector<1x64xf32>
      %49 = vector.broadcast %48 : vector<1x64xf32> to vector<8x64xf32>
      %50 = arith.addf %47, %49 : vector<8x64xf32>
      %51 = arith.index_cast %42 : i32 to index
      %c0_33 = arith.constant 0 : index
      %52 = vector.load %arg11[%51, %c0_33] : memref<8x64xf32, #tpu.memory_space<vmem>>, vector<8x64xf32>
      tpu.vector_store %arg11[%51, %c0_33], %50 {strides = array<i32>} : memref<8x64xf32, #tpu.memory_space<vmem>>, vector<8x64xf32>,
    } else {
    }
    %c8_i32 = arith.constant 8 : i32
    %3 = arith.muli %arg1, %c8_i32 : i32
    %4 = tpu.assume_multiple %3, 8 : i32
    %c0 = arith.constant 0 : index
    %5 = arith.index_cast %4 : i32 to index
    %c0_1 = arith.constant 0 : index
    %6 = vector.load %arg2[%c0, %5, %c0_1] : memref<1x8x32xf32, #tpu.memory_space<vmem>>, vector<1x8x32xf32>
    %7 = vector.shape_cast %6 : vector<1x8x32xf32> to vector<8x32xf32>
    %c0_2 = arith.constant 0 : index
    %c0_3 = arith.constant 0 : index
    %8 = vector.load %arg3[%c0_2, %c0_3] : memref<32x32xf32, #tpu.memory_space<vmem>>, vector<32x32xf32>
    %cst = arith.constant dense<0.000000e+00> : vector<8x32xf32>
    %9 = tpu.matmul %7, %8, %cst {dimension_numbers = #tpu.dot_dimension_numbers<[1], [0], [0], [1], [0, 0, 1, 1], [], []>} : vector<8x32xf32>, vector<32x32xf32>, vector<8x32xf32> -> vector<8x32xf32>
    %c0_4 = arith.constant 0 : index
    %c0_5 = arith.constant 0 : index
    %10 = vector.load %arg4[%c0_4, %c0_5] : memref<1x32xf32, #tpu.memory_space<vmem>>, vector<1x32xf32>
    %11 = vector.broadcast %10 : vector<1x32xf32> to vector<8x32xf32>
    %12 = arith.addf %9, %11 : vector<8x32xf32>
    %c0_6 = arith.constant 0 : index
    %c0_7 = arith.constant 0 : index
    %13 = vector.load %arg11[%c0_6, %c0_7] : memref<8x64xf32, #tpu.memory_space<vmem>>, vector<8x32xf32>
    %c0_8 = arith.constant 0 : index
    %c32 = arith.constant 32 : index
    %14 = vector.load %arg11[%c0_8, %c32] : memref<8x64xf32, #tpu.memory_space<vmem>>, vector<8x32xf32>
    %cst_9 = arith.constant dense<0.000000e+00> : vector<8x8xf32>
    %15 = tpu.matmul %12, %13, %cst_9 {dimension_numbers = #tpu.dot_dimension_numbers<[1], [1], [0], [0], [0, 0, 1, 0], [], []>} : vector<8x32xf32>, vector<8x32xf32>, vector<8x8xf32> -> vector<8x8xf32>
    %cst_10 = arith.constant dense<0xFF800000> : vector<8xf32>
    %16 = vector.multi_reduction <maximumf>, %15, %cst_10 [1] : vector<8x8xf32> to vector<8xf32>
    %17 = vector.shape_cast %16 : vector<8xf32> to vector<8x1xf32>
    %18 = vector.broadcast %17 : vector<8x1xf32> to vector<8x8xf32>
    %19 = arith.subf %15, %18 : vector<8x8xf32>
    %20 = math.exp %19 : vector<8x8xf32>
    %cst_11 = arith.constant dense<0.000000e+00> : vector<8xf32>
    %21 = vector.multi_reduction <add>, %20, %cst_11 [1] : vector<8x8xf32> to vector<8xf32>
    %22 = vector.shape_cast %21 : vector<8xf32> to vector<8x1xf32>
    %23 = tpu.reciprocal %22 {approx = true} : vector<8x1xf32> -> vector<8x1xf32>
    %24 = arith.mulf %22, %23 : vector<8x1xf32>
    %cst_12 = arith.constant 2.000000e+00 : f32
    %25 = vector.broadcast %cst_12 : f32 to vector<8x1xf32>
    %26 = arith.subf %25, %24 : vector<8x1xf32>
    %27 = arith.mulf %23, %26 : vector<8x1xf32>
    %28 = vector.broadcast %27 : vector<8x1xf32> to vector<8x8xf32>
    %29 = arith.mulf %20, %28 : vector<8x8xf32>
    %cst_13 = arith.constant dense<0.000000e+00> : vector<8x32xf32>
    %30 = tpu.matmul %29, %14, %cst_13 {dimension_numbers = #tpu.dot_dimension_numbers<[1], [0], [0], [1], [0, 0, 1, 1], [], []>} : vector<8x8xf32>, vector<8x32xf32>, vector<8x32xf32> -> vector<8x32xf32>
    %c0_14 = arith.constant 0 : index
    %c0_15 = arith.constant 0 : index
    %31 = vector.load %arg7[%c0_14, %c0_15] : memref<32x32xf32, #tpu.memory_space<vmem>>, vector<32x32xf32>
    %cst_16 = arith.constant dense<0.000000e+00> : vector<8x32xf32>
    %32 = tpu.matmul %30, %31, %cst_16 {dimension_numbers = #tpu.dot_dimension_numbers<[1], [0], [0], [1], [0, 0, 1, 1], [], []>} : vector<8x32xf32>, vector<32x32xf32>, vector<8x32xf32> -> vector<8x32xf32>
    %c0_17 = arith.constant 0 : index
    %c0_18 = arith.constant 0 : index
    %33 = vector.load %arg8[%c0_17, %c0_18] : memref<1x32xf32, #tpu.memory_space<vmem>>, vector<1x32xf32>
    %34 = vector.broadcast %33 : vector<1x32xf32> to vector<8x32xf32>
    %35 = arith.addf %32, %34 : vector<8x32xf32>
    %c0_19 = arith.constant 0 : index
    %c0_20 = arith.constant 0 : index
    %c0_21 = arith.constant 0 : index
    %36 = vector.load %arg9[%c0_19, %c0_20, %c0_21] : memref<1x8x32xf32, #tpu.memory_space<vmem>>, vector<1x8x32xf32>
    %37 = vector.shape_cast %36 : vector<1x8x32xf32> to vector<8x32xf32>
    %38 = vector.shape_cast %35 : vector<8x32xf32> to vector<1x8x32xf32>
    tpu.vector_store %arg9[%c0_19, %c0_20, %c0_21], %38 {strides = array<i32>} : memref<1x8x32xf32, #tpu.memory_space<vmem>>, vector<1x8x32xf32>,
    %c0_22 = arith.constant 0 : index
    %c0_23 = arith.constant 0 : index
    %c0_24 = arith.constant 0 : index
    %39 = vector.load %arg10[%c0_22, %c0_23, %c0_24] : memref<1x8x8xf32, #tpu.memory_space<vmem>>, vector<1x8x8xf32>
    %40 = vector.shape_cast %39 : vector<1x8x8xf32> to vector<8x8xf32>
    %41 = vector.shape_cast %29 : vector<8x8xf32> to vector<1x8x8xf32>
    tpu.vector_store %arg10[%c0_22, %c0_23, %c0_24], %41 {strides = array<i32>} : memref<1x8x8xf32, #tpu.memory_space<vmem>>, vector<1x8x8xf32>,
    return
  }
  func.func @transform_0(%arg0: i32, %arg1: i32) -> (i32, i32, i32) {
    %c0_i32 = arith.constant 0 : i32
    %c0_i32_0 = arith.constant 0 : i32
    %c0_i32_1 = arith.constant 0 : i32
    return %arg0, %c0_i32, %c0_i32_0 : i32, i32, i32
  }
  func.func @transform_1(%arg0: i32, %arg1: i32) -> (i32, i32) {
    %c0_i32 = arith.constant 0 : i32
    %c0_i32_0 = arith.constant 0 : i32
    %c0_i32_1 = arith.constant 0 : i32
    return %c0_i32, %c0_i32_0 : i32, i32
  }
  func.func @transform_2(%arg0: i32, %arg1: i32) -> (i32, i32) {
    %c0_i32 = arith.constant 0 : i32
    %c0_i32_0 = arith.constant 0 : i32
    %c0_i32_1 = arith.constant 0 : i32
    return %c0_i32, %c0_i32_0 : i32, i32
  }
  func.func @transform_3(%arg0: i32, %arg1: i32) -> (i32, i32) {
    %c0_i32 = arith.constant 0 : i32
    %c0_i32_0 = arith.constant 0 : i32
    %c0_i32_1 = arith.constant 0 : i32
    return %c0_i32, %c0_i32_0 : i32, i32
  }
  func.func @transform_4(%arg0: i32, %arg1: i32) -> (i32, i32) {
    %c0_i32 = arith.constant 0 : i32
    %c0_i32_0 = arith.constant 0 : i32
    %c0_i32_1 = arith.constant 0 : i32
    return %c0_i32, %c0_i32_0 : i32, i32
  }
  func.func @transform_5(%arg0: i32, %arg1: i32) -> (i32, i32) {
    %c0_i32 = arith.constant 0 : i32
    %c0_i32_0 = arith.constant 0 : i32
    %c0_i32_1 = arith.constant 0 : i32
    return %c0_i32, %c0_i32_0 : i32, i32
  }
  func.func @transform_6(%arg0: i32, %arg1: i32) -> (i32, i32) {
    %c0_i32 = arith.constant 0 : i32
    %c0_i32_0 = arith.constant 0 : i32
    %c0_i32_1 = arith.constant 0 : i32
    return %c0_i32, %c0_i32_0 : i32, i32
  }
  func.func @transform_7(%arg0: i32, %arg1: i32) -> (i32, i32, i32) {
    %c0_i32 = arith.constant 0 : i32
    %c0_i32_0 = arith.constant 0 : i32
    return %arg0, %arg1, %c0_i32 : i32, i32, i32
  }
  func.func @transform_8(%arg0: i32, %arg1: i32) -> (i32, i32, i32) {
    %c0_i32 = arith.constant 0 : i32
    %c0_i32_0 = arith.constant 0 : i32
    return %arg0, %arg1, %c0_i32 : i32, i32, i32
  }
}

module attributes {stable_mosaic.version = 11 : i64} {
  func.func @_attn_kernel(%arg0: i32, %arg1: i32, %arg2: memref<1x8x32xf32, #tpu.memory_space<vmem>>, %arg3: memref<32x32xf32, #tpu.memory_space<vmem>>, %arg4: memref<1x32xf32, #tpu.memory_space<vmem>>, %arg5: memref<32x64xf32, #tpu.memory_space<vmem>>, %arg6: memref<1x64xf32, #tpu.memory_space<vmem>>, %arg7: memref<32x32xf32, #tpu.memory_space<vmem>>, %arg8: memref<1x32xf32, #tpu.memory_space<vmem>>, %arg9: memref<1x8x32xf32, #tpu.memory_space<vmem>>, %arg10: memref<1x8x8xf32, #tpu.memory_space<vmem>>, %arg11: memref<8x64xf32, #tpu.memory_space<vmem>>) attributes {dimension_semantics = [#tpu.dimension_semantics<parallel>, #tpu.dimension_semantics<arbitrary>], iteration_bounds = array<i64: 2, 1>, scalar_prefetch = 0 : i64, scratch_operands = 1 : i64, tpu.core_type = #tpu.core_type<tc>, window_params = [{transform_indices = @transform_0, window_bounds = array<i64: 1, 8, 32>}, {pipeline_mode = #tpu.pipeline_mode<synchronous>, transform_indices = @transform_1, window_bounds = array<i64: 32, 32>}, {pipeline_mode = #tpu.pipeline_mode<synchronous>, transform_indices = @transform_2, window_bounds = array<i64: 1, 32>}, {pipeline_mode = #tpu.pipeline_mode<synchronous>, transform_indices = @transform_3, window_bounds = array<i64: 32, 64>}, {pipeline_mode = #tpu.pipeline_mode<synchronous>, transform_indices = @transform_4, window_bounds = array<i64: 1, 64>}, {pipeline_mode = #tpu.pipeline_mode<synchronous>, transform_indices = @transform_5, window_bounds = array<i64: 32, 32>}, {pipeline_mode = #tpu.pipeline_mode<synchronous>, transform_indices = @transform_6, window_bounds = array<i64: 1, 32>}, {transform_indices = @transform_7, window_bounds = array<i64: 1, 8, 32>}, {transform_indices = @transform_8, window_bounds = array<i64: 1, 8, 8>}]} {
    %c0_i32 = arith.constant 0 : i32
    %0 = arith.cmpi eq, %arg1, %c0_i32 : i32
    %1 = arith.extui %0 : i1 to i32
    %c0_i32_0 = arith.constant 0 : i32
    %2 = arith.cmpi ne, %1, %c0_i32_0 : i32
    scf.if %2 {
      %c0_i32_25 = arith.constant 0 : i32
      %42 = tpu.assume_multiple %c0_i32_25, 8 : i32
      %c0_26 = arith.constant 0 : index
      %43 = arith.index_cast %42 : i32 to index
      %c0_27 = arith.constant 0 : index
      %44 = vector.load %arg2[%c0_26, %43, %c0_27] : memref<1x8x32xf32, #tpu.memory_space<vmem>>, vector<1x8x32xf32>
      %45 = vector.shape_cast %44 : vector<1x8x32xf32> to vector<8x32xf32>
      %c0_28 = arith.constant 0 : index
      %c0_29 = arith.constant 0 : index
      %46 = vector.load %arg5[%c0_28, %c0_29] : memref<32x64xf32, #tpu.memory_space<vmem>>, vector<32x64xf32>
      %cst_30 = arith.constant dense<0.000000e+00> : vector<8x64xf32>
      %47 = tpu.matmul %45, %46, %cst_30 {dimension_numbers = #tpu.dot_dimension_numbers<[1], [0], [0], [1], [0, 0, 1, 1], [], []>} : vector<8x32xf32>, vector<32x64xf32>, vector<8x64xf32> -> vector<8x64xf32>
      %c0_31 = arith.constant 0 : index
      %c0_32 = arith.constant 0 : index
      %48 = vector.load %arg6[%c0_31, %c0_32] : memref<1x64xf32, #tpu.memory_space<vmem>>, vector<1x64xf32>
      %49 = vector.broadcast %48 : vector<1x64xf32> to vector<8x64xf32>
      %50 = arith.addf %47, %49 : vector<8x64xf32>
      %51 = arith.index_cast %42 : i32 to index
      %c0_33 = arith.constant 0 : index
      %52 = vector.load %arg11[%51, %c0_33] : memref<8x64xf32, #tpu.memory_space<vmem>>, vector<8x64xf32>
      tpu.vector_store %arg11[%51, %c0_33], %50 {strides = array<i32>} : memref<8x64xf32, #tpu.memory_space<vmem>>, vector<8x64xf32>,
    } else {
    }
    %c8_i32 = arith.constant 8 : i32
    %3 = arith.muli %arg1, %c8_i32 : i32
    %4 = tpu.assume_multiple %3, 8 : i32
    %c0 = arith.constant 0 : index
    %5 = arith.index_cast %4 : i32 to index
    %c0_1 = arith.constant 0 : index
    %6 = vector.load %arg2[%c0, %5, %c0_1] : memref<1x8x32xf32, #tpu.memory_space<vmem>>, vector<1x8x32xf32>
    %7 = vector.shape_cast %6 : vector<1x8x32xf32> to vector<8x32xf32>
    %c0_2 = arith.constant 0 : index
    %c0_3 = arith.constant 0 : index
    %8 = vector.load %arg3[%c0_2, %c0_3] : memref<32x32xf32, #tpu.memory_space<vmem>>, vector<32x32xf32>
    %cst = arith.constant dense<0.000000e+00> : vector<8x32xf32>
    %9 = tpu.matmul %7, %8, %cst {dimension_numbers = #tpu.dot_dimension_numbers<[1], [0], [0], [1], [0, 0, 1, 1], [], []>} : vector<8x32xf32>, vector<32x32xf32>, vector<8x32xf32> -> vector<8x32xf32>
    %c0_4 = arith.constant 0 : index
    %c0_5 = arith.constant 0 : index
    %10 = vector.load %arg4[%c0_4, %c0_5] : memref<1x32xf32, #tpu.memory_space<vmem>>, vector<1x32xf32>
    %11 = vector.broadcast %10 : vector<1x32xf32> to vector<8x32xf32>
    %12 = arith.addf %9, %11 : vector<8x32xf32>
    %c0_6 = arith.constant 0 : index
    %c0_7 = arith.constant 0 : index
    %13 = vector.load %arg11[%c0_6, %c0_7] : memref<8x64xf32, #tpu.memory_space<vmem>>, vector<8x32xf32>
    %c0_8 = arith.constant 0 : index
    %c32 = arith.constant 32 : index
    %14 = vector.load %arg11[%c0_8, %c32] : memref<8x64xf32, #tpu.memory_space<vmem>>, vector<8x32xf32>
    %cst_9 = arith.constant dense<0.000000e+00> : vector<8x8xf32>
    %15 = tpu.matmul %12, %13, %cst_9 {dimension_numbers = #tpu.dot_dimension_numbers<[1], [1], [0], [0], [0, 0, 1, 0], [], []>} : vector<8x32xf32>, vector<8x32xf32>, vector<8x8xf32> -> vector<8x8xf32>
    %cst_10 = arith.constant dense<0xFF800000> : vector<8xf32>
    %16 = vector.multi_reduction <maximumf>, %15, %cst_10 [1] : vector<8x8xf32> to vector<8xf32>
    %17 = vector.shape_cast %16 : vector<8xf32> to vector<8x1xf32>
    %18 = vector.broadcast %17 : vector<8x1xf32> to vector<8x8xf32>
    %19 = arith.subf %15, %18 : vector<8x8xf32>
    %20 = math.exp %19 : vector<8x8xf32>
    %cst_11 = arith.constant dense<0.000000e+00> : vector<8xf32>
    %21 = vector.multi_reduction <add>, %20, %cst_11 [1] : vector<8x8xf32> to vector<8xf32>
    %22 = vector.shape_cast %21 : vector<8xf32> to vector<8x1xf32>
    %23 = tpu.reciprocal %22 {approx = true} : vector<8x1xf32> -> vector<8x1xf32>
    %24 = arith.mulf %22, %23 : vector<8x1xf32>
    %cst_12 = arith.constant 2.000000e+00 : f32
    %25 = vector.broadcast %cst_12 : f32 to vector<8x1xf32>
    %26 = arith.subf %25, %24 : vector<8x1xf32>
    %27 = arith.mulf %23, %26 : vector<8x1xf32>
    %28 = vector.broadcast %27 : vector<8x1xf32> to vector<8x8xf32>
    %29 = arith.mulf %20, %28 : vector<8x8xf32>
    %cst_13 = arith.constant dense<0.000000e+00> : vector<8x32xf32>
    %30 = tpu.matmul %29, %14, %cst_13 {dimension_numbers = #tpu.dot_dimension_numbers<[1], [0], [0], [1], [0, 0, 1, 1], [], []>} : vector<8x8xf32>, vector<8x32xf32>, vector<8x32xf32> -> vector<8x32xf32>
    %c0_14 = arith.constant 0 : index
    %c0_15 = arith.constant 0 : index
    %31 = vector.load %arg7[%c0_14, %c0_15] : memref<32x32xf32, #tpu.memory_space<vmem>>, vector<32x32xf32>
    %cst_16 = arith.constant dense<0.000000e+00> : vector<8x32xf32>
    %32 = tpu.matmul %30, %31, %cst_16 {dimension_numbers = #tpu.dot_dimension_numbers<[1], [0], [0], [1], [0, 0, 1, 1], [], []>} : vector<8x32xf32>, vector<32x32xf32>, vector<8x32xf32> -> vector<8x32xf32>
    %c0_17 = arith.constant 0 : index
    %c0_18 = arith.constant 0 : index
    %33 = vector.load %arg8[%c0_17, %c0_18] : memref<1x32xf32, #tpu.memory_space<vmem>>, vector<1x32xf32>
    %34 = vector.broadcast %33 : vector<1x32xf32> to vector<8x32xf32>
    %35 = arith.addf %32, %34 : vector<8x32xf32>
    %c0_19 = arith.constant 0 : index
    %c0_20 = arith.constant 0 : index
    %c0_21 = arith.constant 0 : index
    %36 = vector.load %arg9[%c0_19, %c0_20, %c0_21] : memref<1x8x32xf32, #tpu.memory_space<vmem>>, vector<1x8x32xf32>
    %37 = vector.shape_cast %36 : vector<1x8x32xf32> to vector<8x32xf32>
    %38 = vector.shape_cast %35 : vector<8x32xf32> to vector<1x8x32xf32>
    tpu.vector_store %arg9[%c0_19, %c0_20, %c0_21], %38 {strides = array<i32>} : memref<1x8x32xf32, #tpu.memory_space<vmem>>, vector<1x8x32xf32>,
    %c0_22 = arith.constant 0 : index
    %c0_23 = arith.constant 0 : index
    %c0_24 = arith.constant 0 : index
    %39 = vector.load %arg10[%c0_22, %c0_23, %c0_24] : memref<1x8x8xf32, #tpu.memory_space<vmem>>, vector<1x8x8xf32>
    %40 = vector.shape_cast %39 : vector<1x8x8xf32> to vector<8x8xf32>
    %41 = vector.shape_cast %29 : vector<8x8xf32> to vector<1x8x8xf32>
    tpu.vector_store %arg10[%c0_22, %c0_23, %c0_24], %41 {strides = array<i32>} : memref<1x8x8xf32, #tpu.memory_space<vmem>>, vector<1x8x8xf32>,
    return
  }
  func.func @transform_0(%arg0: i32, %arg1: i32) -> (i32, i32, i32) {
    %c0_i32 = arith.constant 0 : i32
    %c0_i32_0 = arith.constant 0 : i32
    %c0_i32_1 = arith.constant 0 : i32
    return %arg0, %c0_i32, %c0_i32_0 : i32, i32, i32
  }
  func.func @transform_1(%arg0: i32, %arg1: i32) -> (i32, i32) {
    %c0_i32 = arith.constant 0 : i32
    %c0_i32_0 = arith.constant 0 : i32
    %c0_i32_1 = arith.constant 0 : i32
    return %c0_i32, %c0_i32_0 : i32, i32
  }
  func.func @transform_2(%arg0: i32, %arg1: i32) -> (i32, i32) {
    %c0_i32 = arith.constant 0 : i32
    %c0_i32_0 = arith.constant 0 : i32
    %c0_i32_1 = arith.constant 0 : i32
    return %c0_i32, %c0_i32_0 : i32, i32
  }
  func.func @transform_3(%arg0: i32, %arg1: i32) -> (i32, i32) {
    %c0_i32 = arith.constant 0 : i32
    %c0_i32_0 = arith.constant 0 : i32
    %c0_i32_1 = arith.constant 0 : i32
    return %c0_i32, %c0_i32_0 : i32, i32
  }
  func.func @transform_4(%arg0: i32, %arg1: i32) -> (i32, i32) {
    %c0_i32 = arith.constant 0 : i32
    %c0_i32_0 = arith.constant 0 : i32
    %c0_i32_1 = arith.constant 0 : i32
    return %c0_i32, %c0_i32_0 : i32, i32
  }
  func.func @transform_5(%arg0: i32, %arg1: i32) -> (i32, i32) {
    %c0_i32 = arith.constant 0 : i32
    %c0_i32_0 = arith.constant 0 : i32
    %c0_i32_1 = arith.constant 0 : i32
    return %c0_i32, %c0_i32_0 : i32, i32
  }
  func.func @transform_6(%arg0: i32, %arg1: i32) -> (i32, i32) {
    %c0_i32 = arith.constant 0 : i32
    %c0_i32_0 = arith.constant 0 : i32
    %c0_i32_1 = arith.constant 0 : i32
    return %c0_i32, %c0_i32_0 : i32, i32
  }
  func.func @transform_7(%arg0: i32, %arg1: i32) -> (i32, i32, i32) {
    %c0_i32 = arith.constant 0 : i32
    %c0_i32_0 = arith.constant 0 : i32
    return %arg0, %arg1, %c0_i32 : i32, i32, i32
  }
  func.func @transform_8(%arg0: i32, %arg1: i32) -> (i32, i32, i32) {
    %c0_i32 = arith.constant 0 : i32
    %c0_i32_0 = arith.constant 0 : i32
    return %arg0, %arg1, %c0_i32 : i32, i32, i32
  }
}

</mosaic_0001>

<llo_original>
// kernel: tpu_custom_call.1
$region0: #{tpu_custom_call.1}
  #allocation0 [shape = 'u32[]', space=smem, size = 0x4, offset = 0x4, fixed_abs, tag = 'smem constant byte address 0x4 - core index']
  #allocation1 [shape = 'u32[72,128]{1,0:T(1,128)}', space=vmem, size = 0x9000, scoped, tag = 'internal scratch']
  #allocation2 [shape = 'f32[8,64]{1,0:T(8,128)}', space=vmem, size = 0x1000, scoped, tag = 'scratch operand']
  %s0 = inlined_call_operand.hbm [shape: f32[2,8,32], index: 0, kind: input, shape index: {}]
  %s1 = inlined_call_operand.hbm [shape: f32[32,32], index: 1, kind: input, shape index: {}]
  %s2 = inlined_call_operand.vmem [shape: f32[1,32], index: 2, kind: input, shape index: {}]
  %s3 = inlined_call_operand.hbm [shape: f32[32,64], index: 3, kind: input, shape index: {}]
  %s4 = inlined_call_operand.vmem [shape: f32[1,64], index: 4, kind: input, shape index: {}]
  %s5 = inlined_call_operand.hbm [shape: f32[32,32], index: 5, kind: input, shape index: {}]
  %s6 = inlined_call_operand.vmem [shape: f32[1,32], index: 6, kind: input, shape index: {}]
  %s7 = inlined_call_operand.hbm [shape: f32[2,8,32], index: 7, kind: output, shape index: {0}]
  %s8 = inlined_call_operand.hbm [shape: f32[2,8,8], index: 8, kind: output, shape index: {1}]
  %9 = xla_tuple %s7, %s8
  %s10 = sld [smem:[#allocation0]]
  $region89: #{tpu_custom_call.1} parent=0
    _
  %s12 = ssub.s32 1, %s10
  %s13 = scalar_select 0, %s12, %s10
  $region1: #{tpu_custom_call.1} parent=0
    #allocation3 [shape = 'u8[4096]{0}', space=vmem, size = 0x1000, scoped, tag = 'input window, operand 0, single buffered']
    #allocation4 [shape = 's32[2]{0}', space=sflag, size = 0x8, scoped, tag = 'scoped memory for tpu_custom_call.1']
    #allocation5 [shape = 's32[2]{0}', space=sflag, size = 0x8, scoped, tag = 'scoped memory for tpu_custom_call.1']
    #allocation6 [shape = 'u8[16384]{0}', space=vmem, size = 0x4000, scoped, tag = 'input window, operand 1, single buffered']
    #allocation7 [shape = 's32[1]{0}', space=sflag, size = 0x4, scoped, tag = 'scoped memory for tpu_custom_call.1']
    #allocation8 [shape = 'u8[16384]{0}', space=vmem, size = 0x4000, scoped, tag = 'input window, operand 3, single buffered']
    #allocation9 [shape = 'u8[16384]{0}', space=vmem, size = 0x4000, scoped, tag = 'input window, operand 5, single buffered']
    #allocation10 [shape = 's32[1]{0}', space=sflag, size = 0x4, scoped, tag = 'scoped memory for tpu_custom_call.1']
    #allocation11 [shape = 'u8[8192]{0}', space=vmem, size = 0x2000, scoped, tag = 'output window, operand 0']
    #allocation12 [shape = 'u8[8192]{0}', space=vmem, size = 0x2000, scoped, tag = 'output window, operand 1']
    #allocation13 [shape = 's32[2]{0}', space=sflag, size = 0x8, scoped, tag = 'scoped memory for tpu_custom_call.1']
    %14 = vsyncpa [#allocation4], 0
    %15 = vsyncpa [#allocation7], 0
    %16 = vsyncpa [#allocation10], 0
    %17 = vsyncpa [#allocation5], 0
    %s18 = scalar_lea.sflag [#allocation5], 1
    %19 = vsyncpa %s18, 0
    %20 = vsyncpa [#allocation13], 0
    %s21 = scalar_lea.sflag [#allocation13], 1
    %22 = vsyncpa %s21, 0
    loop: start=0, step=1, limit=4
    $region2: #{tpu_custom_call.1} parent=1 // loop_pre_header
      _
    $region3: #{tpu_custom_call.1} parent=1 // loop_header
      %s24 = sphi 0, %s28
      %p25 = scmp.ge.s32.totalorder %s24, 4
      %s31 = sphi 0, %s43
      %s32 = sphi 0, %s39
      %s33 = sphi 0, %s31
      %s34 = sphi 0, %s32
      %s35 = sphi 0, %s33
      %s36 = sphi 0, %s34
      %s46 = sphi 0, %s48
      %s49 = sphi 0, %s46
      %s50 = sphi 0, %s49
      %s66 = sphi 0, %s50
      %s70 = sphi 0, %s70
      %s72 = sphi 0, %s70
      %s73 = sphi 0, %s72
      %s87 = sphi 0, %s73
      %s91 = sphi 0, %s91
      %s93 = sphi 0, %s91
      %s94 = sphi 0, %s93
      %s108 = sphi 0, %s94
      %s112 = sphi 0, %s112
      %s114 = sphi 0, %s112
      %s115 = sphi 0, %s114
      %s129 = sphi 0, %s115
      %s133 = sphi 0, %s133
      %s135 = sphi 0, %s133
      %s136 = sphi 0, %s135
      %s150 = sphi 0, %s136
      %s154 = sphi 0, %s154
      %s156 = sphi 0, %s154
      %s157 = sphi 0, %s156
      %s171 = sphi 0, %s157
      %s175 = sphi 0, %s175
      %s177 = sphi 0, %s175
      %s178 = sphi 0, %s177
      %s192 = sphi 0, %s178
      %s200 = sphi 0, %s202
      %s203 = sphi 0, %s200
      %s204 = sphi 0, %s203
      %s220 = sphi 0, %s204
      %s228 = sphi 0, %s230
      %s231 = sphi 0, %s228
      %s232 = sphi 0, %s231
      %s248 = sphi 0, %s232
    $region4: #{tpu_custom_call.1} parent=1 // loop_header_branch
      %27 = sbr.rel (%p25) target = $region8
    $region5: #{tpu_custom_call.1} parent=1 // loop_body
      %s29 = ssub.s32 %s24, 1
      %s30 = ssub.s32 %s24, 2
      %s37 = sadd.s32 1, %s32
      %p38 = scmp.ge.s32.totalorder %s37, 1
      %s39 = scalar_select %p38, 0, %s37
      %s40 = sadd.s32 1, %s31
      %s41 = scalar_select %p38, %s40, %s31
      %p42 = scmp.ge.s32.totalorder %s41, 2
      %s43 = scalar_select %p42, 0, %s41
      %s44 = ssub.s32 %s31, %s43
      %p45 = scmp.eq.s32.totalorder %s44, 0
      %s47 = sadd.s32 %s46, 1
      %s48 = scalar_select %p45, %s46, %s47
      %p51 = pneg %p45
      %p52 = scmp.eq.s32.totalorder %s24, 1
      %p53 = por %p51, %p52
      %p54 = scmp.ne.s32.totalorder %s46, %s49
      %p55 = scmp.eq.s32.totalorder %s24, 0
      %p56 = por %p54, %p55
      %p57 = scmp.ne.s32.totalorder %s46, %s49
      %p58 = scmp.eq.s32.totalorder %s29, 1
      %p59 = por %p57, %p58
      %p60 = scmp.ne.s32.totalorder %s49, %s50
      %p61 = scmp.eq.s32.totalorder %s29, 0
      %p62 = por %p60, %p61
      %p63 = scmp.ne.s32.totalorder %s49, %s50
      %p64 = scmp.eq.s32.totalorder %s30, 1
      %p65 = por %p63, %p64
      %p67 = scmp.ne.s32.totalorder %s50, %s66
      %p68 = scmp.eq.s32.totalorder %s30, 0
      %p69 = por %p67, %p68
      %s71 = sadd.s32 %s70, 1
      %p74 = scmp.eq.s32.totalorder %s24, 1
      %p75 = scmp.ne.s32.totalorder %s70, %s72
      %p76 = scmp.eq.s32.totalorder %s24, 0
      %p77 = por %p75, %p76
      %p78 = scmp.ne.s32.totalorder %s70, %s72
      %p79 = scmp.eq.s32.totalorder %s29, 1
      %p80 = por %p78, %p79
      %p81 = scmp.ne.s32.totalorder %s72, %s73
      %p82 = scmp.eq.s32.totalorder %s29, 0
      %p83 = por %p81, %p82
      %p84 = scmp.ne.s32.totalorder %s72, %s73
      %p85 = scmp.eq.s32.totalorder %s30, 1
      %p86 = por %p84, %p85
      %p88 = scmp.ne.s32.totalorder %s73, %s87
      %p89 = scmp.eq.s32.totalorder %s30, 0
      %p90 = por %p88, %p89
      %s92 = sadd.s32 %s91, 1
      %p95 = scmp.eq.s32.totalorder %s24, 1
      %p96 = scmp.ne.s32.totalorder %s91, %s93
      %p97 = scmp.eq.s32.totalorder %s24, 0
      %p98 = por %p96, %p97
      %p99 = scmp.ne.s32.totalorder %s91, %s93
      %p100 = scmp.eq.s32.totalorder %s29, 1
      %p101 = por %p99, %p100
      %p102 = scmp.ne.s32.totalorder %s93, %s94
      %p103 = scmp.eq.s32.totalorder %s29, 0
      %p104 = por %p102, %p103
      %p105 = scmp.ne.s32.totalorder %s93, %s94
      %p106 = scmp.eq.s32.totalorder %s30, 1
      %p107 = por %p105, %p106
      %p109 = scmp.ne.s32.totalorder %s94, %s108
      %p110 = scmp.eq.s32.totalorder %s30, 0
      %p111 = por %p109, %p110
      %s113 = sadd.s32 %s112, 1
      %p116 = scmp.eq.s32.totalorder %s24, 1
      %p117 = scmp.ne.s32.totalorder %s112, %s114
      %p118 = scmp.eq.s32.totalorder %s24, 0
      %p119 = por %p117, %p118
      %p120 = scmp.ne.s32.totalorder %s112, %s114
      %p121 = scmp.eq.s32.totalorder %s29, 1
      %p122 = por %p120, %p121
      %p123 = scmp.ne.s32.totalorder %s114, %s115
      %p124 = scmp.eq.s32.totalorder %s29, 0
      %p125 = por %p123, %p124
      %p126 = scmp.ne.s32.totalorder %s114, %s115
      %p127 = scmp.eq.s32.totalorder %s30, 1
      %p128 = por %p126, %p127
      %p130 = scmp.ne.s32.totalorder %s115, %s129
      %p131 = scmp.eq.s32.totalorder %s30, 0
      %p132 = por %p130, %p131
      %s134 = sadd.s32 %s133, 1
      %p137 = scmp.eq.s32.totalorder %s24, 1
      %p138 = scmp.ne.s32.totalorder %s133, %s135
      %p139 = scmp.eq.s32.totalorder %s24, 0
      %p140 = por %p138, %p139
      %p141 = scmp.ne.s32.totalorder %s133, %s135
      %p142 = scmp.eq.s32.totalorder %s29, 1
      %p143 = por %p141, %p142
      %p144 = scmp.ne.s32.totalorder %s135, %s136
      %p145 = scmp.eq.s32.totalorder %s29, 0
      %p146 = por %p144, %p145
      %p147 = scmp.ne.s32.totalorder %s135, %s136
      %p148 = scmp.eq.s32.totalorder %s30, 1
      %p149 = por %p147, %p148
      %p151 = scmp.ne.s32.totalorder %s136, %s150
      %p152 = scmp.eq.s32.totalorder %s30, 0
      %p153 = por %p151, %p152
      %s155 = sadd.s32 %s154, 1
      %p158 = scmp.eq.s32.totalorder %s24, 1
      %p159 = scmp.ne.s32.totalorder %s154, %s156
      %p160 = scmp.eq.s32.totalorder %s24, 0
      %p161 = por %p159, %p160
      %p162 = scmp.ne.s32.totalorder %s154, %s156
      %p163 = scmp.eq.s32.totalorder %s29, 1
      %p164 = por %p162, %p163
      %p165 = scmp.ne.s32.totalorder %s156, %s157
      %p166 = scmp.eq.s32.totalorder %s29, 0
      %p167 = por %p165, %p166
      %p168 = scmp.ne.s32.totalorder %s156, %s157
      %p169 = scmp.eq.s32.totalorder %s30, 1
      %p170 = por %p168, %p169
      %p172 = scmp.ne.s32.totalorder %s157, %s171
      %p173 = scmp.eq.s32.totalorder %s30, 0
      %p174 = por %p172, %p173
      %s176 = sadd.s32 %s175, 1
      %p179 = scmp.eq.s32.totalorder %s24, 1
      %p180 = scmp.ne.s32.totalorder %s175, %s177
      %p181 = scmp.eq.s32.totalorder %s24, 0
      %p182 = por %p180, %p181
      %p183 = scmp.ne.s32.totalorder %s175, %s177
      %p184 = scmp.eq.s32.totalorder %s29, 1
      %p185 = por %p183, %p184
      %p186 = scmp.ne.s32.totalorder %s177, %s178
      %p187 = scmp.eq.s32.totalorder %s29, 0
      %p188 = por %p186, %p187
      %p189 = scmp.ne.s32.totalorder %s177, %s178
      %p190 = scmp.eq.s32.totalorder %s30, 1
      %p191 = por %p189, %p190
      %p193 = scmp.ne.s32.totalorder %s178, %s192
      %p194 = scmp.eq.s32.totalorder %s30, 0
      %p195 = por %p193, %p194
      %s196 = ssub.s32 %s31, %s43
      %s197 = ssub.s32 %s32, %s39
      %s198 = sor.u32 %s196, %s197
      %p199 = scmp.eq.s32.totalorder %s198, 0
      %s201 = sadd.s32 %s200, 1
      %s202 = scalar_select %p199, %s200, %s201
      %p205 = pneg %p199
      %p206 = scmp.eq.s32.totalorder %s24, 1
      %p207 = por %p205, %p206
      %p208 = scmp.ne.s32.totalorder %s200, %s203
      %p209 = scmp.eq.s32.totalorder %s24, 0
      %p210 = por %p208, %p209
      %p211 = scmp.ne.s32.totalorder %s200, %s203
      %p212 = scmp.eq.s32.totalorder %s29, 1
      %p213 = por %p211, %p212
      %p214 = scmp.ne.s32.totalorder %s203, %s204
      %p215 = scmp.eq.s32.totalorder %s29, 0
      %p216 = por %p214, %p215
      %p217 = scmp.ne.s32.totalorder %s203, %s204
      %p218 = scmp.eq.s32.totalorder %s30, 1
      %p219 = por %p217, %p218
      %p221 = scmp.ne.s32.totalorder %s204, %s220
      %p222 = scmp.eq.s32.totalorder %s30, 0
      %p223 = por %p221, %p222
      %s224 = ssub.s32 %s31, %s43
      %s225 = ssub.s32 %s32, %s39
      %s226 = sor.u32 %s224, %s225
      %p227 = scmp.eq.s32.totalorder %s226, 0
      %s229 = sadd.s32 %s228, 1
      %s230 = scalar_select %p227, %s228, %s229
      %p233 = pneg %p227
      %p234 = scmp.eq.s32.totalorder %s24, 1
      %p235 = por %p233, %p234
      %p236 = scmp.ne.s32.totalorder %s228, %s231
      %p237 = scmp.eq.s32.totalorder %s24, 0
      %p238 = por %p236, %p237
      %p239 = scmp.ne.s32.totalorder %s228, %s231
      %p240 = scmp.eq.s32.totalorder %s29, 1
      %p241 = por %p239, %p240
      %p242 = scmp.ne.s32.totalorder %s231, %s232
      %p243 = scmp.eq.s32.totalorder %s29, 0
      %p244 = por %p242, %p243
      %p245 = scmp.ne.s32.totalorder %s231, %s232
      %p246 = scmp.eq.s32.totalorder %s30, 1
      %p247 = por %p245, %p246
      %p249 = scmp.ne.s32.totalorder %s232, %s248
      %p250 = scmp.eq.s32.totalorder %s30, 0
      %p251 = por %p249, %p250
      %p252 = scmp.le.s32.totalorder 1, %s24
      %p253 = scmp.lt.s32.totalorder %s24, 3
      %p254 = pnand %p252, %p253
      %p255 = pneg %p254
      // Predicated region
      $region9: #{tpu_custom_call.1} parent=5 // pred_check
        _
      $region10: #{tpu_custom_call.1} parent=5 // pred_check_branch
        %257 = sbr.rel (%p254) target = $region12
      $region11: #{tpu_custom_call.1} parent=5 // pred_region
        %s258 = ssub.s32 %s24, 1
        // Predicated region
        $region13: #{tpu_custom_call.1} parent=11 // pred_check
          %p259 = pneg %p62
        $region14: #{tpu_custom_call.1} parent=11 // pred_check_branch
          %261 = sbr.rel (%p259) target = $region16
        $region15: #{tpu_custom_call.1} parent=11 // pred_region
          %263 = vsyncadd [#allocation4], 0
          %s264 = smul.addr %s33, 8
          %s265 = scalar_lea.hbm %s0, %s264
          %s267 = sshll.u32 %s265, 4
          %s268 = int_to_ptr.hbm [resolvable:$true] %s267
          %s269 = sshll.u32 [#allocation3], 4
          %s270 = int_to_ptr.vmem [resolvable:$true] %s269
          %272 = dma.hbm_to_vmem [thread:$0]  %s268, 128, %s270, [#allocation4]
        $region16: #{tpu_custom_call.1} parent=11 // pred_fallthru
          _
        // Predicated region
        $region17: #{tpu_custom_call.1} parent=11 // pred_check
          %p273 = pneg %p83
        $region18: #{tpu_custom_call.1} parent=11 // pred_check_branch
          %275 = sbr.rel (%p273) target = $region20
        $region19: #{tpu_custom_call.1} parent=11 // pred_region
          %277 = vsyncadd [#allocation7], 0
          %s278 = sshll.u32 %s1, 4
          %s279 = int_to_ptr.hbm [resolvable:$true] %s278
          %s280 = sshll.u32 [#allocation6], 4
          %s281 = int_to_ptr.vmem [resolvable:$true] %s280
          %286 = dma.hbm_to_vmem [thread:$0]  %s279, 512, %s281, [#allocation7], 128, 128, 8
        $region20: #{tpu_custom_call.1} parent=11 // pred_fallthru
          _
        // Predicated region
        $region21: #{tpu_custom_call.1} parent=11 // pred_check
          %p287 = pneg %p104
        $region22: #{tpu_custom_call.1} parent=11 // pred_check_branch
          %289 = sbr.rel (%p287) target = $region24
        $region23: #{tpu_custom_call.1} parent=11 // pred_region
          _
        $region24: #{tpu_custom_call.1} parent=11 // pred_fallthru
          _
        // Predicated region
        $region25: #{tpu_custom_call.1} parent=11 // pred_check
          %p290 = pneg %p125
        $region26: #{tpu_custom_call.1} parent=11 // pred_check_branch
          %292 = sbr.rel (%p290) target = $region28
        $region27: #{tpu_custom_call.1} parent=11 // pred_region
          %294 = vsyncadd [#allocation7], 0
          %s295 = sshll.u32 %s3, 4
          %s296 = int_to_ptr.hbm [resolvable:$true] %s295
          %s297 = sshll.u32 [#allocation8], 4
          %s298 = int_to_ptr.vmem [resolvable:$true] %s297
          %303 = dma.hbm_to_vmem [thread:$0]  %s296, 512, %s298, [#allocation7], 128, 128, 8
        $region28: #{tpu_custom_call.1} parent=11 // pred_fallthru
          _
        // Predicated region
        $region29: #{tpu_custom_call.1} parent=11 // pred_check
          %p304 = pneg %p146
        $region30: #{tpu_custom_call.1} parent=11 // pred_check_branch
          %306 = sbr.rel (%p304) target = $region32
        $region31: #{tpu_custom_call.1} parent=11 // pred_region
          _
        $region32: #{tpu_custom_call.1} parent=11 // pred_fallthru
          _
        // Predicated region
        $region33: #{tpu_custom_call.1} parent=11 // pred_check
          %p307 = pneg %p167
        $region34: #{tpu_custom_call.1} parent=11 // pred_check_branch
          %309 = sbr.rel (%p307) target = $region36
        $region35: #{tpu_custom_call.1} parent=11 // pred_region
          %311 = vsyncadd [#allocation10], 0
          %s312 = sshll.u32 %s5, 4
          %s313 = int_to_ptr.hbm [resolvable:$true] %s312
          %s314 = sshll.u32 [#allocation9], 4
          %s315 = int_to_ptr.vmem [resolvable:$true] %s314
          %320 = dma.hbm_to_vmem [thread:$0]  %s313, 512, %s315, [#allocation10], 128, 128, 8
        $region36: #{tpu_custom_call.1} parent=11 // pred_fallthru
          _
        // Predicated region
        $region37: #{tpu_custom_call.1} parent=11 // pred_check
          %p321 = pneg %p188
        $region38: #{tpu_custom_call.1} parent=11 // pred_check_branch
          %323 = sbr.rel (%p321) target = $region40
        $region39: #{tpu_custom_call.1} parent=11 // pred_region
          _
        $region40: #{tpu_custom_call.1} parent=11 // pred_fallthru
          _
      $region12: #{tpu_custom_call.1} parent=5 // pred_fallthru
        _
      %p324 = scmp.lt.s32.totalorder %s24, 2
      // Predicated region
      $region41: #{tpu_custom_call.1} parent=5 // pred_check
        %p325 = pneg %p324
      $region42: #{tpu_custom_call.1} parent=5 // pred_check_branch
        %327 = sbr.rel (%p325) target = $region44
      $region43: #{tpu_custom_call.1} parent=5 // pred_region
        _
      $region44: #{tpu_custom_call.1} parent=5 // pred_fallthru
        _
      %p328 = scmp.le.s32.totalorder 1, %s24
      %p329 = scmp.lt.s32.totalorder %s24, 3
      %p330 = pnand %p328, %p329
      %p331 = pneg %p330
      // Predicated region
      $region45: #{tpu_custom_call.1} parent=5 // pred_check
        _
      $region46: #{tpu_custom_call.1} parent=5 // pred_check_branch
        %333 = sbr.rel (%p330) target = $region48
      $region47: #{tpu_custom_call.1} parent=5 // pred_region
        %s334 = ssub.s32 %s24, 1
        // Predicated region
        $region49: #{tpu_custom_call.1} parent=47 // pred_check
          %p335 = pneg %p62
        $region50: #{tpu_custom_call.1} parent=47 // pred_check_branch
          %337 = sbr.rel (%p335) target = $region52
        $region51: #{tpu_custom_call.1} parent=47 // pred_region
          %339 = dma.done [#allocation4], 128
        $region52: #{tpu_custom_call.1} parent=47 // pred_fallthru
          _
        // Predicated region
        $region53: #{tpu_custom_call.1} parent=47 // pred_check
          %p340 = pneg %p83
        $region54: #{tpu_custom_call.1} parent=47 // pred_check_branch
          %342 = sbr.rel (%p340) target = $region56
        $region55: #{tpu_custom_call.1} parent=47 // pred_region
          %344 = dma.done [#allocation7], 512
        $region56: #{tpu_custom_call.1} parent=47 // pred_fallthru
          _
        // Predicated region
        $region57: #{tpu_custom_call.1} parent=47 // pred_check
          %p345 = pneg %p125
        $region58: #{tpu_custom_call.1} parent=47 // pred_check_branch
          %347 = sbr.rel (%p345) target = $region60
        $region59: #{tpu_custom_call.1} parent=47 // pred_region
          %349 = dma.done [#allocation7], 512
        $region60: #{tpu_custom_call.1} parent=47 // pred_fallthru
          _
        // Predicated region
        $region61: #{tpu_custom_call.1} parent=47 // pred_check
          %p350 = pneg %p167
        $region62: #{tpu_custom_call.1} parent=47 // pred_check_branch
          %352 = sbr.rel (%p350) target = $region64
        $region63: #{tpu_custom_call.1} parent=47 // pred_region
          %354 = dma.done [#allocation10], 512
        $region64: #{tpu_custom_call.1} parent=47 // pred_fallthru
          _
        %p355 = pneg %p62
        %p356 = pneg %p59
        %p357 = pneg %p83
        %p358 = pneg %p80
        %p359 = pneg %p104
        %p360 = pneg %p101
        %p361 = pneg %p125
        %p362 = pneg %p122
        %p363 = pneg %p146
        %p364 = pneg %p143
        %p365 = pneg %p167
        %p366 = pneg %p164
        %p367 = pneg %p188
        %p368 = pneg %p185
        %p369 = pneg %p216
        %p370 = pneg %p213
        %s371 = sand.u32 %s203, 1
        %s372 = scalar_lea.sflag [#allocation5], %s371
        %s373 = sand.u32 %s203, 1
        %s374 = smul.addr %s373, 8
        %s375 = scalar_lea.vmem [#allocation11], %s374
        %p376 = pneg %p244
        %p377 = pneg %p241
        %s378 = sand.u32 %s231, 1
        %s379 = scalar_lea.sflag [#allocation13], %s378
        %s380 = sand.u32 %s231, 1
        %s381 = smul.addr %s380, 8
        %s382 = scalar_lea.vmem [#allocation12], %s381
        %p383 = scmp.eq.s32.totalorder %s34, 0
        // Predicated region
        $region65: #{tpu_custom_call.1} parent=47 // pred_check
          %p384 = pneg %p383
        $region66: #{tpu_custom_call.1} parent=47 // pred_check_branch
          %386 = sbr.rel (%p384) target = $region68
        $region67: #{tpu_custom_call.1} parent=47 // pred_region
          %v387 = vld [vmem:[#allocation3] sm:$0xff]
          %v388 = vld [vmem:[#allocation8] sm:$0xff]
          %v389 = vld [vmem:[#allocation8 + $0x8] sm:$0xff]
          %v390 = vld [vmem:[#allocation8 + $0x10] sm:$0xff]
          %v391 = vld [vmem:[#allocation8 + $0x18] sm:$0xff]
          %v392 = vld [vmem:[%s4] sm:$0x1]
          %v394 = vperm.slane %v392, 0
          %vm396 = vcmask 261120
          %v398 = vsel %vm396, %v387, 0
          %400 = vmatpush.msra.mxu0 0.0
          %401 = vmatpush.msra.mxu0 0.0
          %402 = vmatpush.msra.mxu0 0.0
          %403 = vmatpush.msra.mxu0 0.0
          %404 = vmatpush.msra.mxu0 0.0
          %405 = vmatpush.msra.mxu0 0.0
          %406 = vmatpush.msra.mxu0 0.0
          %407 = vmatpush.msra.mxu0 0.0
          %408 = vmatpush.msra.mxu0 0.0
          %409 = vmatpush.msra.mxu0 0.0
          %410 = vmatpush.msra.mxu0 0.0
          %411 = vmatpush.msra.mxu0 0.0
          %412 = vmatpush.msra.mxu0 %v391
          %413 = vmatpush.msra.mxu0 %v390
          %414 = vmatpush.msra.mxu0 %v389
          %415 = vmatpush.msra.mxu0 %v388
          %416 = vmatmul.f32.gmra.mxu0 %v398
          %v417 = vpop.f32.mrf.mxu0
          %v418 = vadd.f32 %v394, %v417
          %419 = vdwg.mxu0
          %vm420 = vcmask 523264
          %421 = vst.msk [vmem:[#allocation2] sm:$0xff] %vm420, %v418
        $region68: #{tpu_custom_call.1} parent=47 // pred_fallthru
          _
        %s422 = smul.u32 %s34, 8
        %s423 = scalar_lea.vmem [#allocation3], %s422
        %v424 = vld [vmem:[%s423] sm:$0xff]
        %v425 = vld [vmem:[#allocation6] sm:$0xff]
        %v426 = vld [vmem:[#allocation6 + $0x8] sm:$0xff]
        %v427 = vld [vmem:[#allocation6 + $0x10] sm:$0xff]
        %v428 = vld [vmem:[#allocation6 + $0x18] sm:$0xff]
        %v429 = vld [vmem:[%s2] sm:$0x1]
        %v431 = vperm.slane %v429, 0
        %vm433 = vcmask 261120
        %v435 = vsel %vm433, %v424, 0
        %437 = vmatpush.msra.mxu0 0.0
        %438 = vmatpush.msra.mxu0 0.0
        %439 = vmatpush.msra.mxu0 0.0
        %440 = vmatpush.msra.mxu0 0.0
        %441 = vmatpush.msra.mxu0 0.0
        %442 = vmatpush.msra.mxu0 0.0
        %443 = vmatpush.msra.mxu0 0.0
        %444 = vmatpush.msra.mxu0 0.0
        %445 = vmatpush.msra.mxu0 0.0
        %446 = vmatpush.msra.mxu0 0.0
        %447 = vmatpush.msra.mxu0 0.0
        %448 = vmatpush.msra.mxu0 0.0
        %449 = vmatpush.msra.mxu0 %v428
        %450 = vmatpush.msra.mxu0 %v427
        %451 = vmatpush.msra.mxu0 %v426
        %452 = vmatpush.msra.mxu0 %v425
        %453 = vmatmul.f32.gmra.mxu0 %v435
        %v454 = vpop.f32.mrf.mxu0
        %v455 = vadd.f32 %v431, %v454
        %456 = vdwg.mxu0
        %v457 = vld [vmem:[#allocation2] sm:$0xff]
        %v459 = vsel %vm433, %v455, 0
        %v462 = vsel %vm433, %v457, 0
        %464 = vmatpush.xpose.msra.mxu0 0.0
        %465 = vmatpush.xpose.msra.mxu0 0.0
        %466 = vmatpush.xpose.msra.mxu0 0.0
        %467 = vmatpush.xpose.msra.mxu0 0.0
        %468 = vmatpush.xpose.msra.mxu0 0.0
        %469 = vmatpush.xpose.msra.mxu0 0.0
        %470 = vmatpush.xpose.msra.mxu0 0.0
        %471 = vmatpush.xpose.msra.mxu0 0.0
        %472 = vmatpush.xpose.msra.mxu0 0.0
        %473 = vmatpush.xpose.msra.mxu0 0.0
        %474 = vmatpush.xpose.msra.mxu0 0.0
        %475 = vmatpush.xpose.msra.mxu0 0.0
        %476 = vmatpush.xpose.msra.mxu0 0.0
        %477 = vmatpush.xpose.msra.mxu0 0.0
        %478 = vmatpush.xpose.msra.mxu0 0.0
        %479 = vmatpush.xpose.msra.mxu0 %v462
        %480 = vmatmul.f32.gmra.mxu0 %v459
        %v481 = vpop.f32.mrf.mxu0
        %v482 = vadd.f32 0.0, %v481
        %483 = vdwg.mxu0
        %vm484 = vcmask 64512
        %v485 = vsel %vm484, %v482, -inf
        %486 = vmax.xlane.f32.xlu0 %v485
        %v487 = vpop.xlane.xlu0 %486
        %v488 = vsub.f32 %v482, %v487
        %v489 = vmul.f32 %v488, 1.442695
        %v490 = vpow.pop %v489
        %v491 = vsel %vm484, %v490, 0.0
        %492 = vadd.xlane.f32.xlu0 %v491
        %v493 = vpop.xlane.xlu0 %492
        %v494 = vrcp.pop %v493
        %v495 = vmul.f32 %v493, %v494
        %v496 = vsub.f32 2.0, %v495
        %v497 = vmul.f32 %v494, %v496
        %v498 = vmul.f32 %v490, %v497
        %499 = vrot.lane.b32.xlu0 %v457, 96
        %v500 = vpop.permute.xlu0 %499
        %v503 = vsel %vm484, %v498, 0
        %505 = vmatpush.msra.mxu0 0.0
        %506 = vmatpush.msra.mxu0 0.0
        %507 = vmatpush.msra.mxu0 0.0
        %508 = vmatpush.msra.mxu0 0.0
        %509 = vmatpush.msra.mxu0 0.0
        %510 = vmatpush.msra.mxu0 0.0
        %511 = vmatpush.msra.mxu0 0.0
        %512 = vmatpush.msra.mxu0 0.0
        %513 = vmatpush.msra.mxu0 0.0
        %514 = vmatpush.msra.mxu0 0.0
        %515 = vmatpush.msra.mxu0 0.0
        %516 = vmatpush.msra.mxu0 0.0
        %517 = vmatpush.msra.mxu0 0.0
        %518 = vmatpush.msra.mxu0 0.0
        %519 = vmatpush.msra.mxu0 0.0
        %520 = vmatpush.msra.mxu0 %v500
        %521 = vmatmul.f32.gmra.mxu0 %v503
        %v522 = vpop.f32.mrf.mxu0
        %v523 = vadd.f32 0.0, %v522
        %524 = vdwg.mxu0
        %v525 = vld [vmem:[#allocation9] sm:$0xff]
        %v526 = vld [vmem:[#allocation9 + $0x8] sm:$0xff]
        %v527 = vld [vmem:[#allocation9 + $0x10] sm:$0xff]
        %v528 = vld [vmem:[#allocation9 + $0x18] sm:$0xff]
        %v529 = vld [vmem:[%s6] sm:$0x1]
        %v531 = vperm.slane %v529, 0
        %v534 = vsel %vm433, %v523, 0
        %536 = vmatpush.msra.mxu0 0.0
        %537 = vmatpush.msra.mxu0 0.0
        %538 = vmatpush.msra.mxu0 0.0
        %539 = vmatpush.msra.mxu0 0.0
        %540 = vmatpush.msra.mxu0 0.0
        %541 = vmatpush.msra.mxu0 0.0
        %542 = vmatpush.msra.mxu0 0.0
        %543 = vmatpush.msra.mxu0 0.0
        %544 = vmatpush.msra.mxu0 0.0
        %545 = vmatpush.msra.mxu0 0.0
        %546 = vmatpush.msra.mxu0 0.0
        %547 = vmatpush.msra.mxu0 0.0
        %548 = vmatpush.msra.mxu0 %v528
        %549 = vmatpush.msra.mxu0 %v527
        %550 = vmatpush.msra.mxu0 %v526
        %551 = vmatpush.msra.mxu0 %v525
        %552 = vmatmul.f32.gmra.mxu0 %v534
        %v553 = vpop.f32.mrf.mxu0
        %v554 = vadd.f32 %v531, %v553
        %555 = vdwg.mxu0
        %556 = vst.msk [vmem:[%s375] sm:$0xff] %vm433, %v554
        %557 = vst.msk [vmem:[%s382] sm:$0xff] %vm484, %v498
        %s558 = sand.u32 %s203, 1
        %s559 = scalar_lea.sflag [#allocation5], %s558
        %s560 = sand.u32 %s203, 1
        %s561 = smul.addr %s560, 8
        %s562 = scalar_lea.vmem [#allocation11], %s561
        %s563 = sand.u32 %s231, 1
        %s564 = scalar_lea.sflag [#allocation13], %s563
        %s565 = sand.u32 %s231, 1
        %s566 = smul.addr %s565, 8
        %s567 = scalar_lea.vmem [#allocation12], %s566
        // Predicated region
        $region69: #{tpu_custom_call.1} parent=47 // pred_check
          %p568 = pneg %p213
        $region70: #{tpu_custom_call.1} parent=47 // pred_check_branch
          %570 = sbr.rel (%p568) target = $region72
        $region71: #{tpu_custom_call.1} parent=47 // pred_region
          %572 = vsyncadd %s559, 0
          %s573 = sadd.s32 %s34, %s33
          %s574 = smul.addr %s573, 8
          %s575 = scalar_lea.hbm %s7, %s574
          %s577 = sshll.u32 %s562, 4
          %s578 = int_to_ptr.vmem [resolvable:$true] %s577
          %s579 = sshll.u32 %s575, 4
          %s580 = int_to_ptr.hbm [resolvable:$true] %s579
          %582 = dma.vmem_to_hbm [thread:$0]  %s578, 128, %s580, %s559
        $region72: #{tpu_custom_call.1} parent=47 // pred_fallthru
          _
        // Predicated region
        $region73: #{tpu_custom_call.1} parent=47 // pred_check
          %p583 = pneg %p241
        $region74: #{tpu_custom_call.1} parent=47 // pred_check_branch
          %585 = sbr.rel (%p583) target = $region76
        $region75: #{tpu_custom_call.1} parent=47 // pred_region
          %587 = vsyncadd %s564, 0
          %s588 = sadd.s32 %s34, %s33
          %s589 = smul.addr %s588, 8
          %s590 = scalar_lea.hbm %s8, %s589
          %s592 = sshll.u32 %s567, 4
          %s593 = int_to_ptr.vmem [resolvable:$true] %s592
          %s594 = sshll.u32 %s590, 4
          %s595 = int_to_ptr.hbm [resolvable:$true] %s594
          %597 = dma.vmem_to_hbm [thread:$0]  %s593, 128, %s595, %s564
        $region76: #{tpu_custom_call.1} parent=47 // pred_fallthru
          _
      $region48: #{tpu_custom_call.1} parent=5 // pred_fallthru
        _
      %p598 = scmp.le.s32.totalorder 2, %s24
      // Predicated region
      $region77: #{tpu_custom_call.1} parent=5 // pred_check
        %p599 = pneg %p598
      $region78: #{tpu_custom_call.1} parent=5 // pred_check_branch
        %601 = sbr.rel (%p599) target = $region80
      $region79: #{tpu_custom_call.1} parent=5 // pred_region
        %s602 = ssub.s32 %s24, 2
        // Predicated region
        $region81: #{tpu_custom_call.1} parent=79 // pred_check
          %p603 = pneg %p219
        $region82: #{tpu_custom_call.1} parent=79 // pred_check_branch
          %605 = sbr.rel (%p603) target = $region84
        $region83: #{tpu_custom_call.1} parent=79 // pred_region
          %s606 = sand.u32 %s204, 1
          %s607 = scalar_lea.sflag [#allocation5], %s606
          %s608 = sand.u32 %s204, 1
          %s609 = smul.addr %s608, 8
          %s610 = scalar_lea.vmem [#allocation11], %s609
          %612 = dma.done %s607, 128
        $region84: #{tpu_custom_call.1} parent=79 // pred_fallthru
          _
        // Predicated region
        $region85: #{tpu_custom_call.1} parent=79 // pred_check
          %p613 = pneg %p247
        $region86: #{tpu_custom_call.1} parent=79 // pred_check_branch
          %615 = sbr.rel (%p613) target = $region88
        $region87: #{tpu_custom_call.1} parent=79 // pred_region
          %s616 = sand.u32 %s232, 1
          %s617 = scalar_lea.sflag [#allocation13], %s616
          %s618 = sand.u32 %s232, 1
          %s619 = smul.addr %s618, 8
          %s620 = scalar_lea.vmem [#allocation12], %s619
          %622 = dma.done %s617, 128
        $region88: #{tpu_custom_call.1} parent=79 // pred_fallthru
          _
      $region80: #{tpu_custom_call.1} parent=5 // pred_fallthru
        _
    $region6: #{tpu_custom_call.1} parent=1 // loop_footer
      %s28 = sadd.s32 1, %s24
    $region7: #{tpu_custom_call.1} parent=1 // loop_footer_branch
      %23 = sbr.rel target = $region3
    $region8: #{tpu_custom_call.1} parent=1 // loop_exit
      _
    %623 = vsyncpa [#allocation4], 1
    %s624 = scalar_lea.sflag [#allocation4], 1
    %625 = vsyncpa %s624, 1
    %626 = vsyncpa [#allocation7], 1
    %627 = vsyncpa [#allocation10], 1
    %628 = vsyncpa [#allocation5], 1
    %s629 = scalar_lea.sflag [#allocation5], 1
    %630 = vsyncpa %s629, 1
    %631 = vsyncpa [#allocation13], 1
    %s632 = scalar_lea.sflag [#allocation13], 1
    %633 = vsyncpa %s632, 1

// kernel: tpu_custom_call.1
$region0: #{tpu_custom_call.1}
  #allocation0 [shape = 'u32[]', space=smem, size = 0x4, offset = 0x4, fixed_abs, tag = 'smem constant byte address 0x4 - core index']
  #allocation1 [shape = 'u32[72,128]{1,0:T(1,128)}', space=vmem, size = 0x9000, scoped, tag = 'internal scratch']
  #allocation2 [shape = 'f32[8,64]{1,0:T(8,128)}', space=vmem, size = 0x1000, scoped, tag = 'scratch operand']
  %s0 = inlined_call_operand.hbm [shape: f32[2,8,32], index: 0, kind: input, shape index: {}]
  %s1 = inlined_call_operand.hbm [shape: f32[32,32], index: 1, kind: input, shape index: {}]
  %s2 = inlined_call_operand.vmem [shape: f32[1,32], index: 2, kind: input, shape index: {}]
  %s3 = inlined_call_operand.hbm [shape: f32[32,64], index: 3, kind: input, shape index: {}]
  %s4 = inlined_call_operand.vmem [shape: f32[1,64], index: 4, kind: input, shape index: {}]
  %s5 = inlined_call_operand.hbm [shape: f32[32,32], index: 5, kind: input, shape index: {}]
  %s6 = inlined_call_operand.vmem [shape: f32[1,32], index: 6, kind: input, shape index: {}]
  %s7 = inlined_call_operand.hbm [shape: f32[2,8,32], index: 7, kind: output, shape index: {0}]
  %s8 = inlined_call_operand.hbm [shape: f32[2,8,8], index: 8, kind: output, shape index: {1}]
  %9 = xla_tuple %s7, %s8
  %s10 = sld [smem:[#allocation0]]
  $region89: #{tpu_custom_call.1} parent=0
    _
  %s12 = ssub.s32 1, %s10
  %s13 = scalar_select 0, %s12, %s10
  $region1: #{tpu_custom_call.1} parent=0
    #allocation3 [shape = 'u8[8192]{0}', space=vmem, size = 0x2000, scoped, tag = 'input window, operand 0']
    #allocation4 [shape = 's32[2]{0}', space=sflag, size = 0x8, scoped, tag = 'scoped memory for tpu_custom_call.1']
    #allocation5 [shape = 's32[2]{0}', space=sflag, size = 0x8, scoped, tag = 'scoped memory for tpu_custom_call.1']
    #allocation6 [shape = 'u8[16384]{0}', space=vmem, size = 0x4000, scoped, tag = 'input window, operand 1, single buffered']
    #allocation7 [shape = 's32[1]{0}', space=sflag, size = 0x4, scoped, tag = 'scoped memory for tpu_custom_call.1']
    #allocation8 [shape = 'u8[16384]{0}', space=vmem, size = 0x4000, scoped, tag = 'input window, operand 3, single buffered']
    #allocation9 [shape = 'u8[16384]{0}', space=vmem, size = 0x4000, scoped, tag = 'input window, operand 5, single buffered']
    #allocation10 [shape = 's32[1]{0}', space=sflag, size = 0x4, scoped, tag = 'scoped memory for tpu_custom_call.1']
    #allocation11 [shape = 'u8[8192]{0}', space=vmem, size = 0x2000, scoped, tag = 'output window, operand 0']
    #allocation12 [shape = 'u8[8192]{0}', space=vmem, size = 0x2000, scoped, tag = 'output window, operand 1']
    #allocation13 [shape = 's32[2]{0}', space=sflag, size = 0x8, scoped, tag = 'scoped memory for tpu_custom_call.1']
    %14 = vsyncpa [#allocation4], 0
    %s15 = scalar_lea.sflag [#allocation4], 1
    %16 = vsyncpa %s15, 0
    %17 = vsyncpa [#allocation7], 0
    %18 = vsyncpa [#allocation10], 0
    %19 = vsyncpa [#allocation5], 0
    %s20 = scalar_lea.sflag [#allocation5], 1
    %21 = vsyncpa %s20, 0
    %22 = vsyncpa [#allocation13], 0
    %s23 = scalar_lea.sflag [#allocation13], 1
    %24 = vsyncpa %s23, 0
    loop: start=0, step=1, limit=4
    $region2: #{tpu_custom_call.1} parent=1 // loop_pre_header
      _
    $region3: #{tpu_custom_call.1} parent=1 // loop_header
      %s26 = sphi 0, %s30
      %p27 = scmp.ge.s32.totalorder %s26, 4
      %s33 = sphi 0, %s45
      %s34 = sphi 0, %s41
      %s35 = sphi 0, %s33
      %s36 = sphi 0, %s34
      %s37 = sphi 0, %s35
      %s38 = sphi 0, %s36
      %s48 = sphi 0, %s50
      %s51 = sphi 0, %s48
      %s52 = sphi 0, %s51
      %s68 = sphi 0, %s52
      %s72 = sphi 0, %s72
      %s74 = sphi 0, %s72
      %s75 = sphi 0, %s74
      %s89 = sphi 0, %s75
      %s93 = sphi 0, %s93
      %s95 = sphi 0, %s93
      %s96 = sphi 0, %s95
      %s110 = sphi 0, %s96
      %s114 = sphi 0, %s114
      %s116 = sphi 0, %s114
      %s117 = sphi 0, %s116
      %s131 = sphi 0, %s117
      %s135 = sphi 0, %s135
      %s137 = sphi 0, %s135
      %s138 = sphi 0, %s137
      %s152 = sphi 0, %s138
      %s156 = sphi 0, %s156
      %s158 = sphi 0, %s156
      %s159 = sphi 0, %s158
      %s173 = sphi 0, %s159
      %s177 = sphi 0, %s177
      %s179 = sphi 0, %s177
      %s180 = sphi 0, %s179
      %s194 = sphi 0, %s180
      %s202 = sphi 0, %s204
      %s205 = sphi 0, %s202
      %s206 = sphi 0, %s205
      %s222 = sphi 0, %s206
      %s230 = sphi 0, %s232
      %s233 = sphi 0, %s230
      %s234 = sphi 0, %s233
      %s250 = sphi 0, %s234
    $region4: #{tpu_custom_call.1} parent=1 // loop_header_branch
      %29 = sbr.rel (%p27) target = $region8
    $region5: #{tpu_custom_call.1} parent=1 // loop_body
      %s31 = ssub.s32 %s26, 1
      %s32 = ssub.s32 %s26, 2
      %s39 = sadd.s32 1, %s34
      %p40 = scmp.ge.s32.totalorder %s39, 1
      %s41 = scalar_select %p40, 0, %s39
      %s42 = sadd.s32 1, %s33
      %s43 = scalar_select %p40, %s42, %s33
      %p44 = scmp.ge.s32.totalorder %s43, 2
      %s45 = scalar_select %p44, 0, %s43
      %s46 = ssub.s32 %s33, %s45
      %p47 = scmp.eq.s32.totalorder %s46, 0
      %s49 = sadd.s32 %s48, 1
      %s50 = scalar_select %p47, %s48, %s49
      %p53 = pneg %p47
      %p54 = scmp.eq.s32.totalorder %s26, 1
      %p55 = por %p53, %p54
      %p56 = scmp.ne.s32.totalorder %s48, %s51
      %p57 = scmp.eq.s32.totalorder %s26, 0
      %p58 = por %p56, %p57
      %p59 = scmp.ne.s32.totalorder %s48, %s51
      %p60 = scmp.eq.s32.totalorder %s31, 1
      %p61 = por %p59, %p60
      %p62 = scmp.ne.s32.totalorder %s51, %s52
      %p63 = scmp.eq.s32.totalorder %s31, 0
      %p64 = por %p62, %p63
      %p65 = scmp.ne.s32.totalorder %s51, %s52
      %p66 = scmp.eq.s32.totalorder %s32, 1
      %p67 = por %p65, %p66
      %p69 = scmp.ne.s32.totalorder %s52, %s68
      %p70 = scmp.eq.s32.totalorder %s32, 0
      %p71 = por %p69, %p70
      %s73 = sadd.s32 %s72, 1
      %p76 = scmp.eq.s32.totalorder %s26, 1
      %p77 = scmp.ne.s32.totalorder %s72, %s74
      %p78 = scmp.eq.s32.totalorder %s26, 0
      %p79 = por %p77, %p78
      %p80 = scmp.ne.s32.totalorder %s72, %s74
      %p81 = scmp.eq.s32.totalorder %s31, 1
      %p82 = por %p80, %p81
      %p83 = scmp.ne.s32.totalorder %s74, %s75
      %p84 = scmp.eq.s32.totalorder %s31, 0
      %p85 = por %p83, %p84
      %p86 = scmp.ne.s32.totalorder %s74, %s75
      %p87 = scmp.eq.s32.totalorder %s32, 1
      %p88 = por %p86, %p87
      %p90 = scmp.ne.s32.totalorder %s75, %s89
      %p91 = scmp.eq.s32.totalorder %s32, 0
      %p92 = por %p90, %p91
      %s94 = sadd.s32 %s93, 1
      %p97 = scmp.eq.s32.totalorder %s26, 1
      %p98 = scmp.ne.s32.totalorder %s93, %s95
      %p99 = scmp.eq.s32.totalorder %s26, 0
      %p100 = por %p98, %p99
      %p101 = scmp.ne.s32.totalorder %s93, %s95
      %p102 = scmp.eq.s32.totalorder %s31, 1
      %p103 = por %p101, %p102
      %p104 = scmp.ne.s32.totalorder %s95, %s96
      %p105 = scmp.eq.s32.totalorder %s31, 0
      %p106 = por %p104, %p105
      %p107 = scmp.ne.s32.totalorder %s95, %s96
      %p108 = scmp.eq.s32.totalorder %s32, 1
      %p109 = por %p107, %p108
      %p111 = scmp.ne.s32.totalorder %s96, %s110
      %p112 = scmp.eq.s32.totalorder %s32, 0
      %p113 = por %p111, %p112
      %s115 = sadd.s32 %s114, 1
      %p118 = scmp.eq.s32.totalorder %s26, 1
      %p119 = scmp.ne.s32.totalorder %s114, %s116
      %p120 = scmp.eq.s32.totalorder %s26, 0
      %p121 = por %p119, %p120
      %p122 = scmp.ne.s32.totalorder %s114, %s116
      %p123 = scmp.eq.s32.totalorder %s31, 1
      %p124 = por %p122, %p123
      %p125 = scmp.ne.s32.totalorder %s116, %s117
      %p126 = scmp.eq.s32.totalorder %s31, 0
      %p127 = por %p125, %p126
      %p128 = scmp.ne.s32.totalorder %s116, %s117
      %p129 = scmp.eq.s32.totalorder %s32, 1
      %p130 = por %p128, %p129
      %p132 = scmp.ne.s32.totalorder %s117, %s131
      %p133 = scmp.eq.s32.totalorder %s32, 0
      %p134 = por %p132, %p133
      %s136 = sadd.s32 %s135, 1
      %p139 = scmp.eq.s32.totalorder %s26, 1
      %p140 = scmp.ne.s32.totalorder %s135, %s137
      %p141 = scmp.eq.s32.totalorder %s26, 0
      %p142 = por %p140, %p141
      %p143 = scmp.ne.s32.totalorder %s135, %s137
      %p144 = scmp.eq.s32.totalorder %s31, 1
      %p145 = por %p143, %p144
      %p146 = scmp.ne.s32.totalorder %s137, %s138
      %p147 = scmp.eq.s32.totalorder %s31, 0
      %p148 = por %p146, %p147
      %p149 = scmp.ne.s32.totalorder %s137, %s138
      %p150 = scmp.eq.s32.totalorder %s32, 1
      %p151 = por %p149, %p150
      %p153 = scmp.ne.s32.totalorder %s138, %s152
      %p154 = scmp.eq.s32.totalorder %s32, 0
      %p155 = por %p153, %p154
      %s157 = sadd.s32 %s156, 1
      %p160 = scmp.eq.s32.totalorder %s26, 1
      %p161 = scmp.ne.s32.totalorder %s156, %s158
      %p162 = scmp.eq.s32.totalorder %s26, 0
      %p163 = por %p161, %p162
      %p164 = scmp.ne.s32.totalorder %s156, %s158
      %p165 = scmp.eq.s32.totalorder %s31, 1
      %p166 = por %p164, %p165
      %p167 = scmp.ne.s32.totalorder %s158, %s159
      %p168 = scmp.eq.s32.totalorder %s31, 0
      %p169 = por %p167, %p168
      %p170 = scmp.ne.s32.totalorder %s158, %s159
      %p171 = scmp.eq.s32.totalorder %s32, 1
      %p172 = por %p170, %p171
      %p174 = scmp.ne.s32.totalorder %s159, %s173
      %p175 = scmp.eq.s32.totalorder %s32, 0
      %p176 = por %p174, %p175
      %s178 = sadd.s32 %s177, 1
      %p181 = scmp.eq.s32.totalorder %s26, 1
      %p182 = scmp.ne.s32.totalorder %s177, %s179
      %p183 = scmp.eq.s32.totalorder %s26, 0
      %p184 = por %p182, %p183
      %p185 = scmp.ne.s32.totalorder %s177, %s179
      %p186 = scmp.eq.s32.totalorder %s31, 1
      %p187 = por %p185, %p186
      %p188 = scmp.ne.s32.totalorder %s179, %s180
      %p189 = scmp.eq.s32.totalorder %s31, 0
      %p190 = por %p188, %p189
      %p191 = scmp.ne.s32.totalorder %s179, %s180
      %p192 = scmp.eq.s32.totalorder %s32, 1
      %p193 = por %p191, %p192
      %p195 = scmp.ne.s32.totalorder %s180, %s194
      %p196 = scmp.eq.s32.totalorder %s32, 0
      %p197 = por %p195, %p196
      %s198 = ssub.s32 %s33, %s45
      %s199 = ssub.s32 %s34, %s41
      %s200 = sor.u32 %s198, %s199
      %p201 = scmp.eq.s32.totalorder %s200, 0
      %s203 = sadd.s32 %s202, 1
      %s204 = scalar_select %p201, %s202, %s203
      %p207 = pneg %p201
      %p208 = scmp.eq.s32.totalorder %s26, 1
      %p209 = por %p207, %p208
      %p210 = scmp.ne.s32.totalorder %s202, %s205
      %p211 = scmp.eq.s32.totalorder %s26, 0
      %p212 = por %p210, %p211
      %p213 = scmp.ne.s32.totalorder %s202, %s205
      %p214 = scmp.eq.s32.totalorder %s31, 1
      %p215 = por %p213, %p214
      %p216 = scmp.ne.s32.totalorder %s205, %s206
      %p217 = scmp.eq.s32.totalorder %s31, 0
      %p218 = por %p216, %p217
      %p219 = scmp.ne.s32.totalorder %s205, %s206
      %p220 = scmp.eq.s32.totalorder %s32, 1
      %p221 = por %p219, %p220
      %p223 = scmp.ne.s32.totalorder %s206, %s222
      %p224 = scmp.eq.s32.totalorder %s32, 0
      %p225 = por %p223, %p224
      %s226 = ssub.s32 %s33, %s45
      %s227 = ssub.s32 %s34, %s41
      %s228 = sor.u32 %s226, %s227
      %p229 = scmp.eq.s32.totalorder %s228, 0
      %s231 = sadd.s32 %s230, 1
      %s232 = scalar_select %p229, %s230, %s231
      %p235 = pneg %p229
      %p236 = scmp.eq.s32.totalorder %s26, 1
      %p237 = por %p235, %p236
      %p238 = scmp.ne.s32.totalorder %s230, %s233
      %p239 = scmp.eq.s32.totalorder %s26, 0
      %p240 = por %p238, %p239
      %p241 = scmp.ne.s32.totalorder %s230, %s233
      %p242 = scmp.eq.s32.totalorder %s31, 1
      %p243 = por %p241, %p242
      %p244 = scmp.ne.s32.totalorder %s233, %s234
      %p245 = scmp.eq.s32.totalorder %s31, 0
      %p246 = por %p244, %p245
      %p247 = scmp.ne.s32.totalorder %s233, %s234
      %p248 = scmp.eq.s32.totalorder %s32, 1
      %p249 = por %p247, %p248
      %p251 = scmp.ne.s32.totalorder %s234, %s250
      %p252 = scmp.eq.s32.totalorder %s32, 0
      %p253 = por %p251, %p252
      %p254 = scmp.le.s32.totalorder 1, %s26
      %p255 = scmp.lt.s32.totalorder %s26, 3
      %p256 = pnand %p254, %p255
      %p257 = pneg %p256
      // Predicated region
      $region9: #{tpu_custom_call.1} parent=5 // pred_check
        _
      $region10: #{tpu_custom_call.1} parent=5 // pred_check_branch
        %259 = sbr.rel (%p256) target = $region12
      $region11: #{tpu_custom_call.1} parent=5 // pred_region
        %s260 = ssub.s32 %s26, 1
        // Predicated region
        $region13: #{tpu_custom_call.1} parent=11 // pred_check
          %p261 = pneg %p85
        $region14: #{tpu_custom_call.1} parent=11 // pred_check_branch
          %263 = sbr.rel (%p261) target = $region16
        $region15: #{tpu_custom_call.1} parent=11 // pred_region
          %265 = vsyncadd [#allocation7], 0
          %s266 = sshll.u32 %s1, 4
          %s267 = int_to_ptr.hbm [resolvable:$true] %s266
          %s268 = sshll.u32 [#allocation6], 4
          %s269 = int_to_ptr.vmem [resolvable:$true] %s268
          %274 = dma.hbm_to_vmem [thread:$0]  %s267, 512, %s269, [#allocation7], 128, 128, 8
        $region16: #{tpu_custom_call.1} parent=11 // pred_fallthru
          _
        // Predicated region
        $region17: #{tpu_custom_call.1} parent=11 // pred_check
          %p275 = pneg %p106
        $region18: #{tpu_custom_call.1} parent=11 // pred_check_branch
          %277 = sbr.rel (%p275) target = $region20
        $region19: #{tpu_custom_call.1} parent=11 // pred_region
          _
        $region20: #{tpu_custom_call.1} parent=11 // pred_fallthru
          _
        // Predicated region
        $region21: #{tpu_custom_call.1} parent=11 // pred_check
          %p278 = pneg %p127
        $region22: #{tpu_custom_call.1} parent=11 // pred_check_branch
          %280 = sbr.rel (%p278) target = $region24
        $region23: #{tpu_custom_call.1} parent=11 // pred_region
          %282 = vsyncadd [#allocation7], 0
          %s283 = sshll.u32 %s3, 4
          %s284 = int_to_ptr.hbm [resolvable:$true] %s283
          %s285 = sshll.u32 [#allocation8], 4
          %s286 = int_to_ptr.vmem [resolvable:$true] %s285
          %291 = dma.hbm_to_vmem [thread:$0]  %s284, 512, %s286, [#allocation7], 128, 128, 8
        $region24: #{tpu_custom_call.1} parent=11 // pred_fallthru
          _
        // Predicated region
        $region25: #{tpu_custom_call.1} parent=11 // pred_check
          %p292 = pneg %p148
        $region26: #{tpu_custom_call.1} parent=11 // pred_check_branch
          %294 = sbr.rel (%p292) target = $region28
        $region27: #{tpu_custom_call.1} parent=11 // pred_region
          _
        $region28: #{tpu_custom_call.1} parent=11 // pred_fallthru
          _
        // Predicated region
        $region29: #{tpu_custom_call.1} parent=11 // pred_check
          %p295 = pneg %p169
        $region30: #{tpu_custom_call.1} parent=11 // pred_check_branch
          %297 = sbr.rel (%p295) target = $region32
        $region31: #{tpu_custom_call.1} parent=11 // pred_region
          %299 = vsyncadd [#allocation10], 0
          %s300 = sshll.u32 %s5, 4
          %s301 = int_to_ptr.hbm [resolvable:$true] %s300
          %s302 = sshll.u32 [#allocation9], 4
          %s303 = int_to_ptr.vmem [resolvable:$true] %s302
          %308 = dma.hbm_to_vmem [thread:$0]  %s301, 512, %s303, [#allocation10], 128, 128, 8
        $region32: #{tpu_custom_call.1} parent=11 // pred_fallthru
          _
        // Predicated region
        $region33: #{tpu_custom_call.1} parent=11 // pred_check
          %p309 = pneg %p190
        $region34: #{tpu_custom_call.1} parent=11 // pred_check_branch
          %311 = sbr.rel (%p309) target = $region36
        $region35: #{tpu_custom_call.1} parent=11 // pred_region
          _
        $region36: #{tpu_custom_call.1} parent=11 // pred_fallthru
          _
      $region12: #{tpu_custom_call.1} parent=5 // pred_fallthru
        _
      %p312 = scmp.lt.s32.totalorder %s26, 2
      // Predicated region
      $region37: #{tpu_custom_call.1} parent=5 // pred_check
        %p313 = pneg %p312
      $region38: #{tpu_custom_call.1} parent=5 // pred_check_branch
        %315 = sbr.rel (%p313) target = $region40
      $region39: #{tpu_custom_call.1} parent=5 // pred_region
        // Predicated region
        $region41: #{tpu_custom_call.1} parent=39 // pred_check
          %p316 = pneg %p58
        $region42: #{tpu_custom_call.1} parent=39 // pred_check_branch
          %318 = sbr.rel (%p316) target = $region44
        $region43: #{tpu_custom_call.1} parent=39 // pred_region
          %s319 = sand.u32 %s48, 1
          %s320 = scalar_lea.sflag [#allocation4], %s319
          %s321 = sand.u32 %s48, 1
          %s322 = smul.addr %s321, 8
          %s323 = scalar_lea.vmem [#allocation3], %s322
          %325 = vsyncadd %s320, 0
          %s326 = smul.addr %s33, 8
          %s327 = scalar_lea.hbm %s0, %s326
          %s329 = sshll.u32 %s327, 4
          %s330 = int_to_ptr.hbm [resolvable:$true] %s329
          %s331 = sshll.u32 %s323, 4
          %s332 = int_to_ptr.vmem [resolvable:$true] %s331
          %334 = dma.hbm_to_vmem [thread:$0]  %s330, 128, %s332, %s320
        $region44: #{tpu_custom_call.1} parent=39 // pred_fallthru
          _
      $region40: #{tpu_custom_call.1} parent=5 // pred_fallthru
        _
      %p335 = scmp.le.s32.totalorder 1, %s26
      %p336 = scmp.lt.s32.totalorder %s26, 3
      %p337 = pnand %p335, %p336
      %p338 = pneg %p337
      // Predicated region
      $region45: #{tpu_custom_call.1} parent=5 // pred_check
        _
      $region46: #{tpu_custom_call.1} parent=5 // pred_check_branch
        %340 = sbr.rel (%p337) target = $region48
      $region47: #{tpu_custom_call.1} parent=5 // pred_region
        %s341 = ssub.s32 %s26, 1
        %s342 = sand.u32 %s51, 1
        %s343 = scalar_lea.sflag [#allocation4], %s342
        %s344 = sand.u32 %s51, 1
        %s345 = smul.addr %s344, 8
        %s346 = scalar_lea.vmem [#allocation3], %s345
        // Predicated region
        $region49: #{tpu_custom_call.1} parent=47 // pred_check
          %p347 = pneg %p64
        $region50: #{tpu_custom_call.1} parent=47 // pred_check_branch
          %349 = sbr.rel (%p347) target = $region52
        $region51: #{tpu_custom_call.1} parent=47 // pred_region
          %351 = dma.done %s343, 128
        $region52: #{tpu_custom_call.1} parent=47 // pred_fallthru
          _
        // Predicated region
        $region53: #{tpu_custom_call.1} parent=47 // pred_check
          %p352 = pneg %p85
        $region54: #{tpu_custom_call.1} parent=47 // pred_check_branch
          %354 = sbr.rel (%p352) target = $region56
        $region55: #{tpu_custom_call.1} parent=47 // pred_region
          %356 = dma.done [#allocation7], 512
        $region56: #{tpu_custom_call.1} parent=47 // pred_fallthru
          _
        // Predicated region
        $region57: #{tpu_custom_call.1} parent=47 // pred_check
          %p357 = pneg %p127
        $region58: #{tpu_custom_call.1} parent=47 // pred_check_branch
          %359 = sbr.rel (%p357) target = $region60
        $region59: #{tpu_custom_call.1} parent=47 // pred_region
          %361 = dma.done [#allocation7], 512
        $region60: #{tpu_custom_call.1} parent=47 // pred_fallthru
          _
        // Predicated region
        $region61: #{tpu_custom_call.1} parent=47 // pred_check
          %p362 = pneg %p169
        $region62: #{tpu_custom_call.1} parent=47 // pred_check_branch
          %364 = sbr.rel (%p362) target = $region64
        $region63: #{tpu_custom_call.1} parent=47 // pred_region
          %366 = dma.done [#allocation10], 512
        $region64: #{tpu_custom_call.1} parent=47 // pred_fallthru
          _
        %s367 = sand.u32 %s51, 1
        %s368 = scalar_lea.sflag [#allocation4], %s367
        %s369 = sand.u32 %s51, 1
        %s370 = smul.addr %s369, 8
        %s371 = scalar_lea.vmem [#allocation3], %s370
        %p372 = pneg %p64
        %p373 = pneg %p61
        %p374 = pneg %p85
        %p375 = pneg %p82
        %p376 = pneg %p106
        %p377 = pneg %p103
        %p378 = pneg %p127
        %p379 = pneg %p124
        %p380 = pneg %p148
        %p381 = pneg %p145
        %p382 = pneg %p169
        %p383 = pneg %p166
        %p384 = pneg %p190
        %p385 = pneg %p187
        %p386 = pneg %p218
        %p387 = pneg %p215
        %s388 = sand.u32 %s205, 1
        %s389 = scalar_lea.sflag [#allocation5], %s388
        %s390 = sand.u32 %s205, 1
        %s391 = smul.addr %s390, 8
        %s392 = scalar_lea.vmem [#allocation11], %s391
        %p393 = pneg %p246
        %p394 = pneg %p243
        %s395 = sand.u32 %s233, 1
        %s396 = scalar_lea.sflag [#allocation13], %s395
        %s397 = sand.u32 %s233, 1
        %s398 = smul.addr %s397, 8
        %s399 = scalar_lea.vmem [#allocation12], %s398
        %p400 = scmp.eq.s32.totalorder %s36, 0
        // Predicated region
        $region65: #{tpu_custom_call.1} parent=47 // pred_check
          %p401 = pneg %p400
        $region66: #{tpu_custom_call.1} parent=47 // pred_check_branch
          %403 = sbr.rel (%p401) target = $region68
        $region67: #{tpu_custom_call.1} parent=47 // pred_region
          %v404 = vld [vmem:[%s346] sm:$0xff]
          %v405 = vld [vmem:[#allocation8] sm:$0xff]
          %v406 = vld [vmem:[#allocation8 + $0x8] sm:$0xff]
          %v407 = vld [vmem:[#allocation8 + $0x10] sm:$0xff]
          %v408 = vld [vmem:[#allocation8 + $0x18] sm:$0xff]
          %v409 = vld [vmem:[%s4] sm:$0x1]
          %v411 = vperm.slane %v409, 0
          %vm413 = vcmask 261120
          %v415 = vsel %vm413, %v404, 0
          %417 = vmatpush.msra.mxu0 0.0
          %418 = vmatpush.msra.mxu0 0.0
          %419 = vmatpush.msra.mxu0 0.0
          %420 = vmatpush.msra.mxu0 0.0
          %421 = vmatpush.msra.mxu0 0.0
          %422 = vmatpush.msra.mxu0 0.0
          %423 = vmatpush.msra.mxu0 0.0
          %424 = vmatpush.msra.mxu0 0.0
          %425 = vmatpush.msra.mxu0 0.0
          %426 = vmatpush.msra.mxu0 0.0
          %427 = vmatpush.msra.mxu0 0.0
          %428 = vmatpush.msra.mxu0 0.0
          %429 = vmatpush.msra.mxu0 %v408
          %430 = vmatpush.msra.mxu0 %v407
          %431 = vmatpush.msra.mxu0 %v406
          %432 = vmatpush.msra.mxu0 %v405
          %433 = vmatmul.f32.gmra.mxu0 %v415
          %v434 = vpop.f32.mrf.mxu0
          %v435 = vadd.f32 %v411, %v434
          %436 = vdwg.mxu0
          %vm437 = vcmask 523264
          %438 = vst.msk [vmem:[#allocation2] sm:$0xff] %vm437, %v435
        $region68: #{tpu_custom_call.1} parent=47 // pred_fallthru
          _
        %s439 = smul.u32 %s36, 8
        %s440 = scalar_lea.vmem %s346, %s439 [#allocation3]
        %v441 = vld [vmem:[%s440] sm:$0xff]
        %v442 = vld [vmem:[#allocation6] sm:$0xff]
        %v443 = vld [vmem:[#allocation6 + $0x8] sm:$0xff]
        %v444 = vld [vmem:[#allocation6 + $0x10] sm:$0xff]
        %v445 = vld [vmem:[#allocation6 + $0x18] sm:$0xff]
        %v446 = vld [vmem:[%s2] sm:$0x1]
        %v448 = vperm.slane %v446, 0
        %vm450 = vcmask 261120
        %v452 = vsel %vm450, %v441, 0
        %454 = vmatpush.msra.mxu0 0.0
        %455 = vmatpush.msra.mxu0 0.0
        %456 = vmatpush.msra.mxu0 0.0
        %457 = vmatpush.msra.mxu0 0.0
        %458 = vmatpush.msra.mxu0 0.0
        %459 = vmatpush.msra.mxu0 0.0
        %460 = vmatpush.msra.mxu0 0.0
        %461 = vmatpush.msra.mxu0 0.0
        %462 = vmatpush.msra.mxu0 0.0
        %463 = vmatpush.msra.mxu0 0.0
        %464 = vmatpush.msra.mxu0 0.0
        %465 = vmatpush.msra.mxu0 0.0
        %466 = vmatpush.msra.mxu0 %v445
        %467 = vmatpush.msra.mxu0 %v444
        %468 = vmatpush.msra.mxu0 %v443
        %469 = vmatpush.msra.mxu0 %v442
        %470 = vmatmul.f32.gmra.mxu0 %v452
        %v471 = vpop.f32.mrf.mxu0
        %v472 = vadd.f32 %v448, %v471
        %473 = vdwg.mxu0
        %v474 = vld [vmem:[#allocation2] sm:$0xff]
        %v476 = vsel %vm450, %v472, 0
        %v479 = vsel %vm450, %v474, 0
        %481 = vmatpush.xpose.msra.mxu0 0.0
        %482 = vmatpush.xpose.msra.mxu0 0.0
        %483 = vmatpush.xpose.msra.mxu0 0.0
        %484 = vmatpush.xpose.msra.mxu0 0.0
        %485 = vmatpush.xpose.msra.mxu0 0.0
        %486 = vmatpush.xpose.msra.mxu0 0.0
        %487 = vmatpush.xpose.msra.mxu0 0.0
        %488 = vmatpush.xpose.msra.mxu0 0.0
        %489 = vmatpush.xpose.msra.mxu0 0.0
        %490 = vmatpush.xpose.msra.mxu0 0.0
        %491 = vmatpush.xpose.msra.mxu0 0.0
        %492 = vmatpush.xpose.msra.mxu0 0.0
        %493 = vmatpush.xpose.msra.mxu0 0.0
        %494 = vmatpush.xpose.msra.mxu0 0.0
        %495 = vmatpush.xpose.msra.mxu0 0.0
        %496 = vmatpush.xpose.msra.mxu0 %v479
        %497 = vmatmul.f32.gmra.mxu0 %v476
        %v498 = vpop.f32.mrf.mxu0
        %v499 = vadd.f32 0.0, %v498
        %500 = vdwg.mxu0
        %vm501 = vcmask 64512
        %v502 = vsel %vm501, %v499, -inf
        %503 = vmax.xlane.f32.xlu0 %v502
        %v504 = vpop.xlane.xlu0 %503
        %v505 = vsub.f32 %v499, %v504
        %v506 = vmul.f32 %v505, 1.442695
        %v507 = vpow.pop %v506
        %v508 = vsel %vm501, %v507, 0.0
        %509 = vadd.xlane.f32.xlu0 %v508
        %v510 = vpop.xlane.xlu0 %509
        %v511 = vrcp.pop %v510
        %v512 = vmul.f32 %v510, %v511
        %v513 = vsub.f32 2.0, %v512
        %v514 = vmul.f32 %v511, %v513
        %v515 = vmul.f32 %v507, %v514
        %516 = vrot.lane.b32.xlu0 %v474, 96
        %v517 = vpop.permute.xlu0 %516
        %v520 = vsel %vm501, %v515, 0
        %522 = vmatpush.msra.mxu0 0.0
        %523 = vmatpush.msra.mxu0 0.0
        %524 = vmatpush.msra.mxu0 0.0
        %525 = vmatpush.msra.mxu0 0.0
        %526 = vmatpush.msra.mxu0 0.0
        %527 = vmatpush.msra.mxu0 0.0
        %528 = vmatpush.msra.mxu0 0.0
        %529 = vmatpush.msra.mxu0 0.0
        %530 = vmatpush.msra.mxu0 0.0
        %531 = vmatpush.msra.mxu0 0.0
        %532 = vmatpush.msra.mxu0 0.0
        %533 = vmatpush.msra.mxu0 0.0
        %534 = vmatpush.msra.mxu0 0.0
        %535 = vmatpush.msra.mxu0 0.0
        %536 = vmatpush.msra.mxu0 0.0
        %537 = vmatpush.msra.mxu0 %v517
        %538 = vmatmul.f32.gmra.mxu0 %v520
        %v539 = vpop.f32.mrf.mxu0
        %v540 = vadd.f32 0.0, %v539
        %541 = vdwg.mxu0
        %v542 = vld [vmem:[#allocation9] sm:$0xff]
        %v543 = vld [vmem:[#allocation9 + $0x8] sm:$0xff]
        %v544 = vld [vmem:[#allocation9 + $0x10] sm:$0xff]
        %v545 = vld [vmem:[#allocation9 + $0x18] sm:$0xff]
        %v546 = vld [vmem:[%s6] sm:$0x1]
        %v548 = vperm.slane %v546, 0
        %v551 = vsel %vm450, %v540, 0
        %553 = vmatpush.msra.mxu0 0.0
        %554 = vmatpush.msra.mxu0 0.0
        %555 = vmatpush.msra.mxu0 0.0
        %556 = vmatpush.msra.mxu0 0.0
        %557 = vmatpush.msra.mxu0 0.0
        %558 = vmatpush.msra.mxu0 0.0
        %559 = vmatpush.msra.mxu0 0.0
        %560 = vmatpush.msra.mxu0 0.0
        %561 = vmatpush.msra.mxu0 0.0
        %562 = vmatpush.msra.mxu0 0.0
        %563 = vmatpush.msra.mxu0 0.0
        %564 = vmatpush.msra.mxu0 0.0
        %565 = vmatpush.msra.mxu0 %v545
        %566 = vmatpush.msra.mxu0 %v544
        %567 = vmatpush.msra.mxu0 %v543
        %568 = vmatpush.msra.mxu0 %v542
        %569 = vmatmul.f32.gmra.mxu0 %v551
        %v570 = vpop.f32.mrf.mxu0
        %v571 = vadd.f32 %v548, %v570
        %572 = vdwg.mxu0
        %573 = vst.msk [vmem:[%s392] sm:$0xff] %vm450, %v571
        %574 = vst.msk [vmem:[%s399] sm:$0xff] %vm501, %v515
        %s575 = sand.u32 %s205, 1
        %s576 = scalar_lea.sflag [#allocation5], %s575
        %s577 = sand.u32 %s205, 1
        %s578 = smul.addr %s577, 8
        %s579 = scalar_lea.vmem [#allocation11], %s578
        %s580 = sand.u32 %s233, 1
        %s581 = scalar_lea.sflag [#allocation13], %s580
        %s582 = sand.u32 %s233, 1
        %s583 = smul.addr %s582, 8
        %s584 = scalar_lea.vmem [#allocation12], %s583
        // Predicated region
        $region69: #{tpu_custom_call.1} parent=47 // pred_check
          %p585 = pneg %p215
        $region70: #{tpu_custom_call.1} parent=47 // pred_check_branch
          %587 = sbr.rel (%p585) target = $region72
        $region71: #{tpu_custom_call.1} parent=47 // pred_region
          %589 = vsyncadd %s576, 0
          %s590 = sadd.s32 %s36, %s35
          %s591 = smul.addr %s590, 8
          %s592 = scalar_lea.hbm %s7, %s591
          %s594 = sshll.u32 %s579, 4
          %s595 = int_to_ptr.vmem [resolvable:$true] %s594
          %s596 = sshll.u32 %s592, 4
          %s597 = int_to_ptr.hbm [resolvable:$true] %s596
          %599 = dma.vmem_to_hbm [thread:$0]  %s595, 128, %s597, %s576
        $region72: #{tpu_custom_call.1} parent=47 // pred_fallthru
          _
        // Predicated region
        $region73: #{tpu_custom_call.1} parent=47 // pred_check
          %p600 = pneg %p243
        $region74: #{tpu_custom_call.1} parent=47 // pred_check_branch
          %602 = sbr.rel (%p600) target = $region76
        $region75: #{tpu_custom_call.1} parent=47 // pred_region
          %604 = vsyncadd %s581, 0
          %s605 = sadd.s32 %s36, %s35
          %s606 = smul.addr %s605, 8
          %s607 = scalar_lea.hbm %s8, %s606
          %s609 = sshll.u32 %s584, 4
          %s610 = int_to_ptr.vmem [resolvable:$true] %s609
          %s611 = sshll.u32 %s607, 4
          %s612 = int_to_ptr.hbm [resolvable:$true] %s611
          %614 = dma.vmem_to_hbm [thread:$0]  %s610, 128, %s612, %s581
        $region76: #{tpu_custom_call.1} parent=47 // pred_fallthru
          _
      $region48: #{tpu_custom_call.1} parent=5 // pred_fallthru
        _
      %p615 = scmp.le.s32.totalorder 2, %s26
      // Predicated region
      $region77: #{tpu_custom_call.1} parent=5 // pred_check
        %p616 = pneg %p615
      $region78: #{tpu_custom_call.1} parent=5 // pred_check_branch
        %618 = sbr.rel (%p616) target = $region80
      $region79: #{tpu_custom_call.1} parent=5 // pred_region
        %s619 = ssub.s32 %s26, 2
        // Predicated region
        $region81: #{tpu_custom_call.1} parent=79 // pred_check
          %p620 = pneg %p221
        $region82: #{tpu_custom_call.1} parent=79 // pred_check_branch
          %622 = sbr.rel (%p620) target = $region84
        $region83: #{tpu_custom_call.1} parent=79 // pred_region
          %s623 = sand.u32 %s206, 1
          %s624 = scalar_lea.sflag [#allocation5], %s623
          %s625 = sand.u32 %s206, 1
          %s626 = smul.addr %s625, 8
          %s627 = scalar_lea.vmem [#allocation11], %s626
          %629 = dma.done %s624, 128
        $region84: #{tpu_custom_call.1} parent=79 // pred_fallthru
          _
        // Predicated region
        $region85: #{tpu_custom_call.1} parent=79 // pred_check
          %p630 = pneg %p249
        $region86: #{tpu_custom_call.1} parent=79 // pred_check_branch
          %632 = sbr.rel (%p630) target = $region88
        $region87: #{tpu_custom_call.1} parent=79 // pred_region
          %s633 = sand.u32 %s234, 1
          %s634 = scalar_lea.sflag [#allocation13], %s633
          %s635 = sand.u32 %s234, 1
          %s636 = smul.addr %s635, 8
          %s637 = scalar_lea.vmem [#allocation12], %s636
          %639 = dma.done %s634, 128
        $region88: #{tpu_custom_call.1} parent=79 // pred_fallthru
          _
      $region80: #{tpu_custom_call.1} parent=5 // pred_fallthru
        _
    $region6: #{tpu_custom_call.1} parent=1 // loop_footer
      %s30 = sadd.s32 1, %s26
    $region7: #{tpu_custom_call.1} parent=1 // loop_footer_branch
      %25 = sbr.rel target = $region3
    $region8: #{tpu_custom_call.1} parent=1 // loop_exit
      _
    %640 = vsyncpa [#allocation4], 1
    %s641 = scalar_lea.sflag [#allocation4], 1
    %642 = vsyncpa %s641, 1
    %643 = vsyncpa [#allocation7], 1
    %644 = vsyncpa [#allocation10], 1
    %645 = vsyncpa [#allocation5], 1
    %s646 = scalar_lea.sflag [#allocation5], 1
    %647 = vsyncpa %s646, 1
    %648 = vsyncpa [#allocation13], 1
    %s649 = scalar_lea.sflag [#allocation13], 1
    %650 = vsyncpa %s649, 1

</llo_original>
